<compile_context>
chip_gen: v7x
topology: tpu7x:2x2x1
jax: 0.10.0
libtpu: 0.0.40
codegen_flags: <defaults>
</compile_context>

<pallas_src>
import functools

import jax
import jax.numpy as jnp
import numpy as np
from jax.experimental import pallas as pl
from jax.experimental.pallas import tpu as pltpu


def _round_up(x, m):
    return ((x + m - 1) // m) * m


def _chip_tuning():
    """(vmem buffer budget bytes, max batch tile, min grid programs)."""
    kind = ""
    try:
        kind = jax.devices()[0].device_kind.lower()
    except Exception:  # pragma: no cover - defensive
        pass
    if "v7" in kind:
        # 64 MiB VMEM per TC, 2 TCs share HBM -> modest tiles, >=2 programs.
        return 20 << 20, 2048, 2
    if "v6" in kind:
        # 128 MiB physical VMEM, single TC -> big tiles amortize step overhead.
        return 24 << 20, 4096, 1
    # v5e / unknown: single TC, keep the budget conservative but explicit.
    return 12 << 20, 2048, 1


def _onehot_kernel_small_k(idx_ref, out_ref, *, n_fields):
    # idx_ref : (TB, K)  int32  -- labels already shifted by per-field offsets
    # out_ref : (TB, N)  float  -- concatenated one-hot encodings
    idx = idx_ref[...]
    # (1, N) row iota; the compares broadcast it over sublanes.
    col = jax.lax.broadcasted_iota(jnp.int32, (1, out_ref.shape[-1]), 1)
    # Fields occupy disjoint column ranges, so OR-ing per-field equality masks
    # is exactly scatter_(1, index, 1). Accumulate in bool, cast once.
    acc = col == idx[:, 0:1]
    for j in range(1, n_fields):
        acc = acc | (col == idx[:, j:j + 1])
    out_ref[...] = acc.astype(out_ref.dtype)


def _onehot_kernel_mxu(idx_ref, sel_ref, out_ref):
    # idx_ref : (TB, Kp) int32 -- shifted labels, zero-padded to Kp fields
    # sel_ref : (Kp, N)  f32   -- static 0/1 field-selector matrix
    # target[b, c] = shifted index of the field that owns column c.
    idx_f = idx_ref[...].astype(jnp.float32)           # MXU has no int path on v7x
    target = jnp.dot(idx_f, sel_ref[...], preferred_element_type=jnp.float32)
    col = jax.lax.broadcasted_iota(jnp.float32, (1, out_ref.shape[-1]), 1)
    # Exact compare: all values are integers < 2^24, representable in f32.
    out_ref[...] = (col == target).astype(out_ref.dtype)


def one_hot_encode(labels, n_values, *, out_dtype=jnp.float32, use_pallas=None,
                   max_batch_tile=None, vmem_budget_bytes=None):
    """Pallas implementation of OneHotEncoder.forward.

    labels: (B,) or (B, K) integer array.
    n_values: 1-D list/array of field cardinalities (length K).
    use_pallas: True/False to force; None = auto (XLA fallback for tiny outputs).
    """
    n_values = np.asarray(n_values, dtype=np.int32)
    labels = jnp.asarray(labels)
    if labels.ndim == 1:
        labels = labels.reshape(labels.shape[0], -1)
    if n_values.shape[0] != labels.shape[1]:
        raise ValueError(
            "Labels dimension is not consistent with n_values dimension")

    B, K = labels.shape
    n_sum = int(n_values.sum())
    cumsum = np.concatenate([[0], np.cumsum(n_values[:-1])]).astype(np.int32)

    # Fold the static per-field offsets into the index up front (trivial XLA
    # add that fuses upstream); the kernel gets a single real tensor input.
    index = labels.astype(jnp.int32) + jnp.asarray(cumsum)[None, :]

    itemsize = jnp.dtype(out_dtype).itemsize
    if use_pallas is None:
        use_pallas = B * n_sum * itemsize >= (1 << 20)
    if not use_pallas:
        # Tiny problem: kernel launch overhead dominates; plain XLA is faster.
        return jnp.max(jax.nn.one_hot(index, n_sum, dtype=out_dtype), axis=1)

    budget_d, max_tile_d, min_programs = _chip_tuning()
    if vmem_budget_bytes is None:
        vmem_budget_bytes = budget_d
    if max_batch_tile is None:
        max_batch_tile = max_tile_d

    # Sublane multiple for the output dtype: (8,128) f32, (16,128) bf16, ...
    sub = {1: 32, 2: 16, 4: 8}.get(itemsize, 8)

    use_mxu = K >= 8
    if use_mxu:
        k_eff = _round_up(K, 8)
        if k_eff != K:
            index = jnp.pad(index, ((0, 0), (0, k_eff - K)))  # zero fields x zero rows
        sel_np = np.zeros((k_eff, n_sum), np.float32)
        for k in range(K):
            sel_np[k, cumsum[k]:cumsum[k] + int(n_values[k])] = 1.0
        sel = jnp.asarray(sel_np)
    else:
        k_eff = K

    # Honest per-row VMEM footprint (double-buffered; lanes pad to 128).
    out_lane = _round_up(n_sum, 128)
    idx_lane = _round_up(k_eff, 128)
    per_row_bytes = 2 * (out_lane * itemsize + idx_lane * 4)

    if B <= sub:
        tb = B                                    # single block == full dim
    else:
        tb = min(max_batch_tile, max(sub, vmem_budget_bytes // per_row_bytes), B)
        tb = max(sub, (tb // sub) * sub)
        if min_programs > 1 and pl.cdiv(B, tb) < min_programs:
            # Make sure both v7x TensorCores get work.
            tb = min(tb, max(sub, _round_up(pl.cdiv(B, min_programs), sub)))

    grid_b = pl.cdiv(B, tb)                       # ragged last block is masked

    buffer_bytes = tb * per_row_bytes
    if use_mxu:
        buffer_bytes += 2 * k_eff * out_lane * 4
    vmem_limit = int(min(48 << 20, max(24 << 20, buffer_bytes + (4 << 20))))

    if use_mxu:
        kernel = _onehot_kernel_mxu
        in_specs = [
            pl.BlockSpec((tb, k_eff), lambda i: (i, 0)),
            pl.BlockSpec((k_eff, n_sum), lambda i: (0, 0)),
        ]
        operands = (index, sel)
    else:
        kernel = functools.partial(_onehot_kernel_small_k, n_fields=K)
        in_specs = [pl.BlockSpec((tb, K), lambda i: (i, 0))]
        operands = (index,)

    out = pl.pallas_call(
        kernel,
        out_shape=jax.ShapeDtypeStruct((B, n_sum), out_dtype),
        grid_spec=pl.GridSpec(
            grid=(grid_b,),
            in_specs=in_specs,
            out_specs=pl.BlockSpec((tb, n_sum), lambda i: (i, 0)),
        ),
        compiler_params=pltpu.CompilerParams(
            dimension_semantics=("parallel",),
            vmem_limit_bytes=vmem_limit),
    )(*operands)
    return out


def _reference(labels, n_values):
    """Pure-JAX reference mirroring the PyTorch scatter_ semantics."""
    n_values = np.asarray(n_values, dtype=np.int32)
    labels = jnp.asarray(labels)
    if labels.ndim == 1:
        labels = labels.reshape(labels.shape[0], -1)
    cumsum = jnp.asarray(
        np.concatenate([[0], np.cumsum(n_values[:-1])]).astype(np.int32))
    index = labels.astype(jnp.int32) + cumsum[None, :]
    return jnp.max(jax.nn.one_hot(index, int(n_values.sum()),
                                  dtype=jnp.float32), axis=1)


if __name__ == "__main__":
    key = jax.random.PRNGKey(0)
    k1, k2, k3 = jax.random.split(key, 3)

    # Case 1: 4 small fields, B=500 (ragged last block, unrolled-compare path).
    n_values1 = np.array([3, 5, 4, 6], dtype=np.int32)        # N = 18
    labels1 = jnp.stack(
        [jax.random.randint(jax.random.fold_in(k1, j), (500,), 0,
                            int(n_values1[j]), dtype=jnp.int32)
         for j in range(n_values1.shape[0])], axis=1)
    enc1 = jax.block_until_ready(one_hot_encode(labels1, n_values1,
                                                use_pallas=True))
    ref1 = _reference(labels1, n_values1)
    assert enc1.shape == (500, int(n_values1.sum())), enc1.shape
    assert enc1.dtype == jnp.float32, enc1.dtype
    np.testing.assert_allclose(np.asarray(enc1), np.asarray(ref1))

    # Case 2: 10 fields (MXU selector-matmul path), B=260 (ragged batch).
    n_values2 = np.array([3, 4, 5, 6, 7, 3, 4, 5, 6, 7], dtype=np.int32)  # N=50
    labels2 = jnp.stack(
        [jax.random.randint(jax.random.fold_in(k2, j), (260,), 0,
                            int(n_values2[j]), dtype=jnp.int32)
         for j in range(n_values2.shape[0])], axis=1)
    enc2 = jax.block_until_ready(one_hot_encode(labels2, n_values2,
                                                use_pallas=True))
    ref2 = _reference(labels2, n_values2)
    np.testing.assert_allclose(np.asarray(enc2), np.asarray(ref2))

    # Case 3: 1-D labels (single field) exercises the reshape path.
    n_values3 = np.array([7], dtype=np.int32)
    labels3 = jax.random.randint(k3, (64,), 0, 7, dtype=jnp.int32)
    enc3 = jax.block_until_ready(one_hot_encode(labels3, n_values3,
                                                use_pallas=True))
    ref3 = _reference(labels3, n_values3)
    np.testing.assert_allclose(np.asarray(enc3), np.asarray(ref3))

    print("KERNEL_OK")
</pallas_src>

<mosaic_0001>
module attributes {stable_mosaic.version = 11 : i64} {
  func.func @_onehot_kernel_small_k(%arg0: i32, %arg1: memref<496x4xi32, #tpu.memory_space<vmem>>, %arg2: memref<496x18xf32, #tpu.memory_space<vmem>>) attributes {dimension_semantics = [#tpu.dimension_semantics<parallel>], iteration_bounds = array<i64: 2>, scalar_prefetch = 0 : i64, scratch_operands = 0 : i64, tpu.core_type = #tpu.core_type<tc>, window_params = [{transform_indices = @transform_0, window_bounds = array<i64: 496, 4>}, {transform_indices = @transform_1, window_bounds = array<i64: 496, 18>}]} {
    %c0 = arith.constant 0 : index
    %c0_0 = arith.constant 0 : index
    %0 = vector.load %arg1[%c0, %c0_0] : memref<496x4xi32, #tpu.memory_space<vmem>>, vector<496x4xi32>
    %1 = tpu.iota {dimensions = array<i32: 1>} : vector<1x18xi32>
    %2 = vector.extract_strided_slice %0 {offsets = [0, 0], sizes = [496, 1], strides = [1, 1]} : vector<496x4xi32> to vector<496x1xi32>
    %3 = vector.broadcast %1 : vector<1x18xi32> to vector<496x18xi32>
    %4 = vector.broadcast %2 : vector<496x1xi32> to vector<496x18xi32>
    %5 = arith.cmpi eq, %3, %4 : vector<496x18xi32>
    %6 = vector.extract_strided_slice %0 {offsets = [0, 1], sizes = [496, 1], strides = [1, 1]} : vector<496x4xi32> to vector<496x1xi32>
    %7 = vector.broadcast %1 : vector<1x18xi32> to vector<496x18xi32>
    %8 = vector.broadcast %6 : vector<496x1xi32> to vector<496x18xi32>
    %9 = arith.cmpi eq, %7, %8 : vector<496x18xi32>
    %10 = arith.ori %5, %9 : vector<496x18xi1>
    %11 = vector.extract_strided_slice %0 {offsets = [0, 2], sizes = [496, 1], strides = [1, 1]} : vector<496x4xi32> to vector<496x1xi32>
    %12 = vector.broadcast %1 : vector<1x18xi32> to vector<496x18xi32>
    %13 = vector.broadcast %11 : vector<496x1xi32> to vector<496x18xi32>
    %14 = arith.cmpi eq, %12, %13 : vector<496x18xi32>
    %15 = arith.ori %10, %14 : vector<496x18xi1>
    %16 = vector.extract_strided_slice %0 {offsets = [0, 3], sizes = [496, 1], strides = [1, 1]} : vector<496x4xi32> to vector<496x1xi32>
    %17 = vector.broadcast %1 : vector<1x18xi32> to vector<496x18xi32>
    %18 = vector.broadcast %16 : vector<496x1xi32> to vector<496x18xi32>
    %19 = arith.cmpi eq, %17, %18 : vector<496x18xi32>
    %20 = arith.ori %15, %19 : vector<496x18xi1>
    %21 = arith.extui %20 : vector<496x18xi1> to vector<496x18xi32>
    %22 = arith.sitofp %21 : vector<496x18xi32> to vector<496x18xf32>
    %c0_1 = arith.constant 0 : index
    %c0_2 = arith.constant 0 : index
    %23 = vector.load %arg2[%c0_1, %c0_2] : memref<496x18xf32, #tpu.memory_space<vmem>>, vector<496x18xf32>
    tpu.vector_store %arg2[%c0_1, %c0_2], %22 {strides = array<i32>} : memref<496x18xf32, #tpu.memory_space<vmem>>, vector<496x18xf32>,
    return
  }
  func.func @transform_0(%arg0: i32) -> (i32, i32) {
    %c0_i32 = arith.constant 0 : i32
    %c0_i32_0 = arith.constant 0 : i32
    return %arg0, %c0_i32 : i32, i32
  }
  func.func @transform_1(%arg0: i32) -> (i32, i32) {
    %c0_i32 = arith.constant 0 : i32
    %c0_i32_0 = arith.constant 0 : i32
    return %arg0, %c0_i32 : i32, i32
  }
}

</mosaic_0001>

<llo_original>
// kernel: tpu_custom_call.1
$region0: #{tpu_custom_call.1}
  #allocation0 [shape = 'u32[]', space=smem, size = 0x4, offset = 0x4, fixed_abs, tag = 'smem constant byte address 0x4 - core index']
  #allocation1 [shape = 'u32[144,128]{1,0:T(1,128)}', space=vmem, size = 0x12000, scoped, tag = 'internal scratch']
  %s0 = inlined_call_operand.vmem [shape: s32[500,4], index: 0, kind: input, shape index: {}]
  %s1 = inlined_call_operand.vmem [shape: f32[500,18], index: 1, kind: output, shape index: {}]
  %s2 = sld [smem:[#allocation0]]
  $region85: #{tpu_custom_call.1} parent=0
    _
  %s4 = ssub.s32 1, %s2
  %s5 = scalar_select 0, %s4, %s2
  $region1: #{tpu_custom_call.1} parent=0
    #allocation2 [shape = 'u8[507904]{0}', space=vmem, size = 0x7c000, scoped, tag = 'output window, operand 0']
    loop: start=0, step=1, limit=4
    $region2: #{tpu_custom_call.1} parent=1 // loop_pre_header
      _
    $region3: #{tpu_custom_call.1} parent=1 // loop_header
      %s7 = sphi 0, %s11
      %p8 = scmp.ge.s32.totalorder %s7, 4
      %s17 = sphi 0, %s19
      %s20 = sphi 0, %s17
      %s21 = sphi 0, %s20
      %s37 = sphi 0, %s21
      %s43 = sphi 0, %s45
      %s46 = sphi 0, %s43
      %s47 = sphi 0, %s46
      %s63 = sphi 0, %s47
    $region4: #{tpu_custom_call.1} parent=1 // loop_header_branch
      %10 = sbr.rel (%p8) target = $region8
    $region5: #{tpu_custom_call.1} parent=1 // loop_body
      %s12 = ssub.s32 %s7, 1
      %s13 = ssub.s32 %s7, 2
      %s14 = sadd.s32 %s7, 1
      %s15 = ssub.s32 %s7, %s14
      %p16 = scmp.eq.s32.totalorder %s15, 0
      %s18 = sadd.s32 %s17, 1
      %s19 = scalar_select %p16, %s17, %s18
      %p22 = pneg %p16
      %p23 = scmp.eq.s32.totalorder %s7, 1
      %p24 = por %p22, %p23
      %p25 = scmp.ne.s32.totalorder %s17, %s20
      %p26 = scmp.eq.s32.totalorder %s7, 0
      %p27 = por %p25, %p26
      %p28 = scmp.ne.s32.totalorder %s17, %s20
      %p29 = scmp.eq.s32.totalorder %s12, 1
      %p30 = por %p28, %p29
      %p31 = scmp.ne.s32.totalorder %s20, %s21
      %p32 = scmp.eq.s32.totalorder %s12, 0
      %p33 = por %p31, %p32
      %p34 = scmp.ne.s32.totalorder %s20, %s21
      %p35 = scmp.eq.s32.totalorder %s13, 1
      %p36 = por %p34, %p35
      %p38 = scmp.ne.s32.totalorder %s21, %s37
      %p39 = scmp.eq.s32.totalorder %s13, 0
      %p40 = por %p38, %p39
      %s41 = ssub.s32 %s7, %s14
      %p42 = scmp.eq.s32.totalorder %s41, 0
      %s44 = sadd.s32 %s43, 1
      %s45 = scalar_select %p42, %s43, %s44
      %p48 = pneg %p42
      %p49 = scmp.eq.s32.totalorder %s7, 1
      %p50 = por %p48, %p49
      %p51 = scmp.ne.s32.totalorder %s43, %s46
      %p52 = scmp.eq.s32.totalorder %s7, 0
      %p53 = por %p51, %p52
      %p54 = scmp.ne.s32.totalorder %s43, %s46
      %p55 = scmp.eq.s32.totalorder %s12, 1
      %p56 = por %p54, %p55
      %p57 = scmp.ne.s32.totalorder %s46, %s47
      %p58 = scmp.eq.s32.totalorder %s12, 0
      %p59 = por %p57, %p58
      %p60 = scmp.ne.s32.totalorder %s46, %s47
      %p61 = scmp.eq.s32.totalorder %s13, 1
      %p62 = por %p60, %p61
      %p64 = scmp.ne.s32.totalorder %s47, %s63
      %p65 = scmp.eq.s32.totalorder %s13, 0
      %p66 = por %p64, %p65
      %p67 = scmp.le.s32.totalorder 1, %s7
      %p68 = scmp.lt.s32.totalorder %s7, 3
      %p69 = pnand %p67, %p68
      %p70 = pneg %p69
      // Predicated region
      $region9: #{tpu_custom_call.1} parent=5 // pred_check
        _
      $region10: #{tpu_custom_call.1} parent=5 // pred_check_branch
        %72 = sbr.rel (%p69) target = $region12
      $region11: #{tpu_custom_call.1} parent=5 // pred_region
        %s73 = ssub.s32 %s7, 1
      $region12: #{tpu_custom_call.1} parent=5 // pred_fallthru
        _
      %p74 = scmp.lt.s32.totalorder %s7, 2
      // Predicated region
      $region13: #{tpu_custom_call.1} parent=5 // pred_check
        %p75 = pneg %p74
      $region14: #{tpu_custom_call.1} parent=5 // pred_check_branch
        %77 = sbr.rel (%p75) target = $region16
      $region15: #{tpu_custom_call.1} parent=5 // pred_region
        // Predicated region
        $region17: #{tpu_custom_call.1} parent=15 // pred_check
          %p78 = pneg %p27
        $region18: #{tpu_custom_call.1} parent=15 // pred_check_branch
          %80 = sbr.rel (%p78) target = $region20
        $region19: #{tpu_custom_call.1} parent=15 // pred_region
          %s81 = smul.u32 62, %s7
          %s82 = ssub.s32 63, %s81
          %p83 = scmp.lt.s32.totalorder %s82, 62
          %s84 = scalar_select %p83, %s82, 62
          %s85 = smul.u32 128, %s84
          %p86 = scmp.lt.s32.totalorder %s81, 62
          %s87 = scalar_select %p86, %s81, 62
          %s88 = smul.addr %s87, 8
          %s89 = scalar_lea.vmem %s0, %s88
          %s90 = smul.u32 62, %s7
          %s91 = ssub.s32 63, %s90
          %p92 = scmp.lt.s32.totalorder %s91, 62
          %s93 = scalar_select %p92, %s91, 62
          %s94 = smul.u32 128, %s93
        $region20: #{tpu_custom_call.1} parent=15 // pred_fallthru
          _
      $region16: #{tpu_custom_call.1} parent=5 // pred_fallthru
        _
      %p95 = scmp.le.s32.totalorder 1, %s7
      %p96 = scmp.lt.s32.totalorder %s7, 3
      %p97 = pnand %p95, %p96
      %p98 = pneg %p97
      // Predicated region
      $region21: #{tpu_custom_call.1} parent=5 // pred_check
        _
      $region22: #{tpu_custom_call.1} parent=5 // pred_check_branch
        %100 = sbr.rel (%p97) target = $region24
      $region23: #{tpu_custom_call.1} parent=5 // pred_region
        %s101 = ssub.s32 %s7, 1
        %s102 = smul.u32 62, %s12
        %s103 = ssub.s32 63, %s102
        %p104 = scmp.lt.s32.totalorder %s103, 62
        %s105 = scalar_select %p104, %s103, 62
        %s106 = smul.u32 128, %s105
        %p107 = scmp.lt.s32.totalorder %s102, 62
        %s108 = scalar_select %p107, %s102, 62
        %s109 = smul.addr %s108, 8
        %s110 = scalar_lea.vmem %s0, %s109
        %p111 = pneg %p33
        %p112 = pneg %p30
        %p113 = pneg %p59
        %p114 = pneg %p56
        %s115 = sand.u32 %s46, 1
        %s116 = sand.u32 %s46, 1
        %s117 = smul.addr %s116, 496
        %s118 = scalar_lea.vmem [#allocation2], %s117
        %s119 = smul.u32 62, %s12
        %s120 = ssub.s32 63, %s119
        %p121 = scmp.lt.s32.totalorder %s120, 62
        %s122 = scalar_select %p121, %s120, 62
        %s123 = smul.u32 128, %s122
        %p124 = scmp.lt.s32.totalorder %s119, 62
        %s125 = scalar_select %p124, %s119, 62
        %s126 = smul.addr %s125, 8
        %s127 = scalar_lea.vmem %s0, %s126
        %s128 = smul.u32 62, %s12
        %s129 = ssub.s32 63, %s128
        %p130 = scmp.lt.s32.totalorder %s129, 62
        %s131 = scalar_select %p130, %s129, 62
        %s132 = smul.u32 128, %s131
        %s133 = smul.u32 62, %s12
        %s134 = ssub.s32 63, %s133
        %p135 = scmp.lt.s32.totalorder %s134, 62
        %s136 = scalar_select %p135, %s134, 62
        %s137 = smul.u32 128, %s136
        %v138 = vld [vmem:[%s127] sm:$0xff]
        %v139 = vld [vmem:[%s127 + $0x8] sm:$0xff]
        %v140 = vld [vmem:[%s127 + $0x10] sm:$0xff]
        %v141 = vld [vmem:[%s127 + $0x18] sm:$0xff]
        %v142 = vld [vmem:[%s127 + $0x20] sm:$0xff]
        %v143 = vld [vmem:[%s127 + $0x28] sm:$0xff]
        %v144 = vld [vmem:[%s127 + $0x30] sm:$0xff]
        %v145 = vld [vmem:[%s127 + $0x38] sm:$0xff]
        %v146 = vld [vmem:[%s127 + $0x40] sm:$0xff]
        %v147 = vld [vmem:[%s127 + $0x48] sm:$0xff]
        %v148 = vld [vmem:[%s127 + $0x50] sm:$0xff]
        %v149 = vld [vmem:[%s127 + $0x58] sm:$0xff]
        %v150 = vld [vmem:[%s127 + $0x60] sm:$0xff]
        %v151 = vld [vmem:[%s127 + $0x68] sm:$0xff]
        %v152 = vld [vmem:[%s127 + $0x70] sm:$0xff]
        %v153 = vld [vmem:[%s127 + $0x78] sm:$0xff]
        %v154 = vld [vmem:[%s127 + $0x80] sm:$0xff]
        %v155 = vld [vmem:[%s127 + $0x88] sm:$0xff]
        %v156 = vld [vmem:[%s127 + $0x90] sm:$0xff]
        %v157 = vld [vmem:[%s127 + $0x98] sm:$0xff]
        %v158 = vld [vmem:[%s127 + $0xa0] sm:$0xff]
        %v159 = vld [vmem:[%s127 + $0xa8] sm:$0xff]
        %v160 = vld [vmem:[%s127 + $0xb0] sm:$0xff]
        %v161 = vld [vmem:[%s127 + $0xb8] sm:$0xff]
        %v162 = vld [vmem:[%s127 + $0xc0] sm:$0xff]
        %v163 = vld [vmem:[%s127 + $0xc8] sm:$0xff]
        %v164 = vld [vmem:[%s127 + $0xd0] sm:$0xff]
        %v165 = vld [vmem:[%s127 + $0xd8] sm:$0xff]
        %v166 = vld [vmem:[%s127 + $0xe0] sm:$0xff]
        %v167 = vld [vmem:[%s127 + $0xe8] sm:$0xff]
        %v168 = vld [vmem:[%s127 + $0xf0] sm:$0xff]
        %v169 = vld [vmem:[%s127 + $0xf8] sm:$0xff]
        %v170 = vld [vmem:[%s127 + $0x100] sm:$0xff]
        %v171 = vld [vmem:[%s127 + $0x108] sm:$0xff]
        %v172 = vld [vmem:[%s127 + $0x110] sm:$0xff]
        %v173 = vld [vmem:[%s127 + $0x118] sm:$0xff]
        %v174 = vld [vmem:[%s127 + $0x120] sm:$0xff]
        %v175 = vld [vmem:[%s127 + $0x128] sm:$0xff]
        %v176 = vld [vmem:[%s127 + $0x130] sm:$0xff]
        %v177 = vld [vmem:[%s127 + $0x138] sm:$0xff]
        %v178 = vld [vmem:[%s127 + $0x140] sm:$0xff]
        %v179 = vld [vmem:[%s127 + $0x148] sm:$0xff]
        %v180 = vld [vmem:[%s127 + $0x150] sm:$0xff]
        %v181 = vld [vmem:[%s127 + $0x158] sm:$0xff]
        %v182 = vld [vmem:[%s127 + $0x160] sm:$0xff]
        %v183 = vld [vmem:[%s127 + $0x168] sm:$0xff]
        %v184 = vld [vmem:[%s127 + $0x170] sm:$0xff]
        %v185 = vld [vmem:[%s127 + $0x178] sm:$0xff]
        %v186 = vld [vmem:[%s127 + $0x180] sm:$0xff]
        %v187 = vld [vmem:[%s127 + $0x188] sm:$0xff]
        %v188 = vld [vmem:[%s127 + $0x190] sm:$0xff]
        %v189 = vld [vmem:[%s127 + $0x198] sm:$0xff]
        %v190 = vld [vmem:[%s127 + $0x1a0] sm:$0xff]
        %v191 = vld [vmem:[%s127 + $0x1a8] sm:$0xff]
        %v192 = vld [vmem:[%s127 + $0x1b0] sm:$0xff]
        %v193 = vld [vmem:[%s127 + $0x1b8] sm:$0xff]
        %v194 = vld [vmem:[%s127 + $0x1c0] sm:$0xff]
        %v195 = vld [vmem:[%s127 + $0x1c8] sm:$0xff]
        %v196 = vld [vmem:[%s127 + $0x1d0] sm:$0xff]
        %v197 = vld [vmem:[%s127 + $0x1d8] sm:$0xff]
        %v198 = vld [vmem:[%s127 + $0x1e0] sm:$0xff]
        %v199 = vld [vmem:[%s127 + $0x1e8] sm:$0xff]
        %v200 = vlaneseq
        %v201 = vand.u32 %v200, 127
        %202 = vset.pattern.permute.xlu0 0
        %203 = vperm.xlu0 %202, %v138
        %v204 = vpop.permute.xlu0 %203
        %205 = vset.pattern.permute.xlu0 0
        %206 = vperm.xlu0 %205, %v139
        %v207 = vpop.permute.xlu0 %206
        %208 = vset.pattern.permute.xlu0 0
        %209 = vperm.xlu0 %208, %v140
        %v210 = vpop.permute.xlu0 %209
        %211 = vset.pattern.permute.xlu0 0
        %212 = vperm.xlu0 %211, %v141
        %v213 = vpop.permute.xlu0 %212
        %214 = vset.pattern.permute.xlu0 0
        %215 = vperm.xlu0 %214, %v142
        %v216 = vpop.permute.xlu0 %215
        %217 = vset.pattern.permute.xlu0 0
        %218 = vperm.xlu0 %217, %v143
        %v219 = vpop.permute.xlu0 %218
        %220 = vset.pattern.permute.xlu0 0
        %221 = vperm.xlu0 %220, %v144
        %v222 = vpop.permute.xlu0 %221
        %223 = vset.pattern.permute.xlu0 0
        %224 = vperm.xlu0 %223, %v145
        %v225 = vpop.permute.xlu0 %224
        %226 = vset.pattern.permute.xlu0 0
        %227 = vperm.xlu0 %226, %v146
        %v228 = vpop.permute.xlu0 %227
        %229 = vset.pattern.permute.xlu0 0
        %230 = vperm.xlu0 %229, %v147
        %v231 = vpop.permute.xlu0 %230
        %232 = vset.pattern.permute.xlu0 0
        %233 = vperm.xlu0 %232, %v148
        %v234 = vpop.permute.xlu0 %233
        %235 = vset.pattern.permute.xlu0 0
        %236 = vperm.xlu0 %235, %v149
        %v237 = vpop.permute.xlu0 %236
        %238 = vset.pattern.permute.xlu0 0
        %239 = vperm.xlu0 %238, %v150
        %v240 = vpop.permute.xlu0 %239
        %241 = vset.pattern.permute.xlu0 0
        %242 = vperm.xlu0 %241, %v151
        %v243 = vpop.permute.xlu0 %242
        %244 = vset.pattern.permute.xlu0 0
        %245 = vperm.xlu0 %244, %v152
        %v246 = vpop.permute.xlu0 %245
        %247 = vset.pattern.permute.xlu0 0
        %248 = vperm.xlu0 %247, %v153
        %v249 = vpop.permute.xlu0 %248
        %250 = vset.pattern.permute.xlu0 0
        %251 = vperm.xlu0 %250, %v154
        %v252 = vpop.permute.xlu0 %251
        %253 = vset.pattern.permute.xlu0 0
        %254 = vperm.xlu0 %253, %v155
        %v255 = vpop.permute.xlu0 %254
        %256 = vset.pattern.permute.xlu0 0
        %257 = vperm.xlu0 %256, %v156
        %v258 = vpop.permute.xlu0 %257
        %259 = vset.pattern.permute.xlu0 0
        %260 = vperm.xlu0 %259, %v157
        %v261 = vpop.permute.xlu0 %260
        %262 = vset.pattern.permute.xlu0 0
        %263 = vperm.xlu0 %262, %v158
        %v264 = vpop.permute.xlu0 %263
        %265 = vset.pattern.permute.xlu0 0
        %266 = vperm.xlu0 %265, %v159
        %v267 = vpop.permute.xlu0 %266
        %268 = vset.pattern.permute.xlu0 0
        %269 = vperm.xlu0 %268, %v160
        %v270 = vpop.permute.xlu0 %269
        %271 = vset.pattern.permute.xlu0 0
        %272 = vperm.xlu0 %271, %v161
        %v273 = vpop.permute.xlu0 %272
        %274 = vset.pattern.permute.xlu0 0
        %275 = vperm.xlu0 %274, %v162
        %v276 = vpop.permute.xlu0 %275
        %277 = vset.pattern.permute.xlu0 0
        %278 = vperm.xlu0 %277, %v163
        %v279 = vpop.permute.xlu0 %278
        %280 = vset.pattern.permute.xlu0 0
        %281 = vperm.xlu0 %280, %v164
        %v282 = vpop.permute.xlu0 %281
        %283 = vset.pattern.permute.xlu0 0
        %284 = vperm.xlu0 %283, %v165
        %v285 = vpop.permute.xlu0 %284
        %286 = vset.pattern.permute.xlu0 0
        %287 = vperm.xlu0 %286, %v166
        %v288 = vpop.permute.xlu0 %287
        %289 = vset.pattern.permute.xlu0 0
        %290 = vperm.xlu0 %289, %v167
        %v291 = vpop.permute.xlu0 %290
        %292 = vset.pattern.permute.xlu0 0
        %293 = vperm.xlu0 %292, %v168
        %v294 = vpop.permute.xlu0 %293
        %295 = vset.pattern.permute.xlu0 0
        %296 = vperm.xlu0 %295, %v169
        %v297 = vpop.permute.xlu0 %296
        %298 = vset.pattern.permute.xlu0 0
        %299 = vperm.xlu0 %298, %v170
        %v300 = vpop.permute.xlu0 %299
        %301 = vset.pattern.permute.xlu0 0
        %302 = vperm.xlu0 %301, %v171
        %v303 = vpop.permute.xlu0 %302
        %304 = vset.pattern.permute.xlu0 0
        %305 = vperm.xlu0 %304, %v172
        %v306 = vpop.permute.xlu0 %305
        %307 = vset.pattern.permute.xlu0 0
        %308 = vperm.xlu0 %307, %v173
        %v309 = vpop.permute.xlu0 %308
        %310 = vset.pattern.permute.xlu0 0
        %311 = vperm.xlu0 %310, %v174
        %v312 = vpop.permute.xlu0 %311
        %313 = vset.pattern.permute.xlu0 0
        %314 = vperm.xlu0 %313, %v175
        %v315 = vpop.permute.xlu0 %314
        %316 = vset.pattern.permute.xlu0 0
        %317 = vperm.xlu0 %316, %v176
        %v318 = vpop.permute.xlu0 %317
        %319 = vset.pattern.permute.xlu0 0
        %320 = vperm.xlu0 %319, %v177
        %v321 = vpop.permute.xlu0 %320
        %322 = vset.pattern.permute.xlu0 0
        %323 = vperm.xlu0 %322, %v178
        %v324 = vpop.permute.xlu0 %323
        %325 = vset.pattern.permute.xlu0 0
        %326 = vperm.xlu0 %325, %v179
        %v327 = vpop.permute.xlu0 %326
        %328 = vset.pattern.permute.xlu0 0
        %329 = vperm.xlu0 %328, %v180
        %v330 = vpop.permute.xlu0 %329
        %331 = vset.pattern.permute.xlu0 0
        %332 = vperm.xlu0 %331, %v181
        %v333 = vpop.permute.xlu0 %332
        %334 = vset.pattern.permute.xlu0 0
        %335 = vperm.xlu0 %334, %v182
        %v336 = vpop.permute.xlu0 %335
        %337 = vset.pattern.permute.xlu0 0
        %338 = vperm.xlu0 %337, %v183
        %v339 = vpop.permute.xlu0 %338
        %340 = vset.pattern.permute.xlu0 0
        %341 = vperm.xlu0 %340, %v184
        %v342 = vpop.permute.xlu0 %341
        %343 = vset.pattern.permute.xlu0 0
        %344 = vperm.xlu0 %343, %v185
        %v345 = vpop.permute.xlu0 %344
        %346 = vset.pattern.permute.xlu0 0
        %347 = vperm.xlu0 %346, %v186
        %v348 = vpop.permute.xlu0 %347
        %349 = vset.pattern.permute.xlu0 0
        %350 = vperm.xlu0 %349, %v187
        %v351 = vpop.permute.xlu0 %350
        %352 = vset.pattern.permute.xlu0 0
        %353 = vperm.xlu0 %352, %v188
        %v354 = vpop.permute.xlu0 %353
        %355 = vset.pattern.permute.xlu0 0
        %356 = vperm.xlu0 %355, %v189
        %v357 = vpop.permute.xlu0 %356
        %358 = vset.pattern.permute.xlu0 0
        %359 = vperm.xlu0 %358, %v190
        %v360 = vpop.permute.xlu0 %359
        %361 = vset.pattern.permute.xlu0 0
        %362 = vperm.xlu0 %361, %v191
        %v363 = vpop.permute.xlu0 %362
        %364 = vset.pattern.permute.xlu0 0
        %365 = vperm.xlu0 %364, %v192
        %v366 = vpop.permute.xlu0 %365
        %367 = vset.pattern.permute.xlu0 0
        %368 = vperm.xlu0 %367, %v193
        %v369 = vpop.permute.xlu0 %368
        %370 = vset.pattern.permute.xlu0 0
        %371 = vperm.xlu0 %370, %v194
        %v372 = vpop.permute.xlu0 %371
        %373 = vset.pattern.permute.xlu0 0
        %374 = vperm.xlu0 %373, %v195
        %v375 = vpop.permute.xlu0 %374
        %376 = vset.pattern.permute.xlu0 0
        %377 = vperm.xlu0 %376, %v196
        %v378 = vpop.permute.xlu0 %377
        %379 = vset.pattern.permute.xlu0 0
        %380 = vperm.xlu0 %379, %v197
        %v381 = vpop.permute.xlu0 %380
        %382 = vset.pattern.permute.xlu0 0
        %383 = vperm.xlu0 %382, %v198
        %v384 = vpop.permute.xlu0 %383
        %385 = vset.pattern.permute.xlu0 0
        %386 = vperm.xlu0 %385, %v199
        %v387 = vpop.permute.xlu0 %386
        %vm388 = vcmp.eq.s32.totalorder %v201, %v204
        %vm389 = vcmp.eq.s32.totalorder %v201, %v207
        %vm390 = vcmp.eq.s32.totalorder %v201, %v210
        %vm391 = vcmp.eq.s32.totalorder %v201, %v213
        %vm392 = vcmp.eq.s32.totalorder %v201, %v216
        %vm393 = vcmp.eq.s32.totalorder %v201, %v219
        %vm394 = vcmp.eq.s32.totalorder %v201, %v222
        %vm395 = vcmp.eq.s32.totalorder %v201, %v225
        %vm396 = vcmp.eq.s32.totalorder %v201, %v228
        %vm397 = vcmp.eq.s32.totalorder %v201, %v231
        %vm398 = vcmp.eq.s32.totalorder %v201, %v234
        %vm399 = vcmp.eq.s32.totalorder %v201, %v237
        %vm400 = vcmp.eq.s32.totalorder %v201, %v240
        %vm401 = vcmp.eq.s32.totalorder %v201, %v243
        %vm402 = vcmp.eq.s32.totalorder %v201, %v246
        %vm403 = vcmp.eq.s32.totalorder %v201, %v249
        %vm404 = vcmp.eq.s32.totalorder %v201, %v252
        %vm405 = vcmp.eq.s32.totalorder %v201, %v255
        %vm406 = vcmp.eq.s32.totalorder %v201, %v258
        %vm407 = vcmp.eq.s32.totalorder %v201, %v261
        %vm408 = vcmp.eq.s32.totalorder %v201, %v264
        %vm409 = vcmp.eq.s32.totalorder %v201, %v267
        %vm410 = vcmp.eq.s32.totalorder %v201, %v270
        %vm411 = vcmp.eq.s32.totalorder %v201, %v273
        %vm412 = vcmp.eq.s32.totalorder %v201, %v276
        %vm413 = vcmp.eq.s32.totalorder %v201, %v279
        %vm414 = vcmp.eq.s32.totalorder %v201, %v282
        %vm415 = vcmp.eq.s32.totalorder %v201, %v285
        %vm416 = vcmp.eq.s32.totalorder %v201, %v288
        %vm417 = vcmp.eq.s32.totalorder %v201, %v291
        %vm418 = vcmp.eq.s32.totalorder %v201, %v294
        %vm419 = vcmp.eq.s32.totalorder %v201, %v297
        %vm420 = vcmp.eq.s32.totalorder %v201, %v300
        %vm421 = vcmp.eq.s32.totalorder %v201, %v303
        %vm422 = vcmp.eq.s32.totalorder %v201, %v306
        %vm423 = vcmp.eq.s32.totalorder %v201, %v309
        %vm424 = vcmp.eq.s32.totalorder %v201, %v312
        %vm425 = vcmp.eq.s32.totalorder %v201, %v315
        %vm426 = vcmp.eq.s32.totalorder %v201, %v318
        %vm427 = vcmp.eq.s32.totalorder %v201, %v321
        %vm428 = vcmp.eq.s32.totalorder %v201, %v324
        %vm429 = vcmp.eq.s32.totalorder %v201, %v327
        %vm430 = vcmp.eq.s32.totalorder %v201, %v330
        %vm431 = vcmp.eq.s32.totalorder %v201, %v333
        %vm432 = vcmp.eq.s32.totalorder %v201, %v336
        %vm433 = vcmp.eq.s32.totalorder %v201, %v339
        %vm434 = vcmp.eq.s32.totalorder %v201, %v342
        %vm435 = vcmp.eq.s32.totalorder %v201, %v345
        %vm436 = vcmp.eq.s32.totalorder %v201, %v348
        %vm437 = vcmp.eq.s32.totalorder %v201, %v351
        %vm438 = vcmp.eq.s32.totalorder %v201, %v354
        %vm439 = vcmp.eq.s32.totalorder %v201, %v357
        %vm440 = vcmp.eq.s32.totalorder %v201, %v360
        %vm441 = vcmp.eq.s32.totalorder %v201, %v363
        %vm442 = vcmp.eq.s32.totalorder %v201, %v366
        %vm443 = vcmp.eq.s32.totalorder %v201, %v369
        %vm444 = vcmp.eq.s32.totalorder %v201, %v372
        %vm445 = vcmp.eq.s32.totalorder %v201, %v375
        %vm446 = vcmp.eq.s32.totalorder %v201, %v378
        %vm447 = vcmp.eq.s32.totalorder %v201, %v381
        %vm448 = vcmp.eq.s32.totalorder %v201, %v384
        %vm449 = vcmp.eq.s32.totalorder %v201, %v387
        %450 = vset.pattern.permute.xlu0 1
        %451 = vperm.xlu0 %450, %v138
        %v452 = vpop.permute.xlu0 %451
        %453 = vset.pattern.permute.xlu0 1
        %454 = vperm.xlu0 %453, %v139
        %v455 = vpop.permute.xlu0 %454
        %456 = vset.pattern.permute.xlu0 1
        %457 = vperm.xlu0 %456, %v140
        %v458 = vpop.permute.xlu0 %457
        %459 = vset.pattern.permute.xlu0 1
        %460 = vperm.xlu0 %459, %v141
        %v461 = vpop.permute.xlu0 %460
        %462 = vset.pattern.permute.xlu0 1
        %463 = vperm.xlu0 %462, %v142
        %v464 = vpop.permute.xlu0 %463
        %465 = vset.pattern.permute.xlu0 1
        %466 = vperm.xlu0 %465, %v143
        %v467 = vpop.permute.xlu0 %466
        %468 = vset.pattern.permute.xlu0 1
        %469 = vperm.xlu0 %468, %v144
        %v470 = vpop.permute.xlu0 %469
        %471 = vset.pattern.permute.xlu0 1
        %472 = vperm.xlu0 %471, %v145
        %v473 = vpop.permute.xlu0 %472
        %474 = vset.pattern.permute.xlu0 1
        %475 = vperm.xlu0 %474, %v146
        %v476 = vpop.permute.xlu0 %475
        %477 = vset.pattern.permute.xlu0 1
        %478 = vperm.xlu0 %477, %v147
        %v479 = vpop.permute.xlu0 %478
        %480 = vset.pattern.permute.xlu0 1
        %481 = vperm.xlu0 %480, %v148
        %v482 = vpop.permute.xlu0 %481
        %483 = vset.pattern.permute.xlu0 1
        %484 = vperm.xlu0 %483, %v149
        %v485 = vpop.permute.xlu0 %484
        %486 = vset.pattern.permute.xlu0 1
        %487 = vperm.xlu0 %486, %v150
        %v488 = vpop.permute.xlu0 %487
        %489 = vset.pattern.permute.xlu0 1
        %490 = vperm.xlu0 %489, %v151
        %v491 = vpop.permute.xlu0 %490
        %492 = vset.pattern.permute.xlu0 1
        %493 = vperm.xlu0 %492, %v152
        %v494 = vpop.permute.xlu0 %493
        %495 = vset.pattern.permute.xlu0 1
        %496 = vperm.xlu0 %495, %v153
        %v497 = vpop.permute.xlu0 %496
        %498 = vset.pattern.permute.xlu0 1
        %499 = vperm.xlu0 %498, %v154
        %v500 = vpop.permute.xlu0 %499
        %501 = vset.pattern.permute.xlu0 1
        %502 = vperm.xlu0 %501, %v155
        %v503 = vpop.permute.xlu0 %502
        %504 = vset.pattern.permute.xlu0 1
        %505 = vperm.xlu0 %504, %v156
        %v506 = vpop.permute.xlu0 %505
        %507 = vset.pattern.permute.xlu0 1
        %508 = vperm.xlu0 %507, %v157
        %v509 = vpop.permute.xlu0 %508
        %510 = vset.pattern.permute.xlu0 1
        %511 = vperm.xlu0 %510, %v158
        %v512 = vpop.permute.xlu0 %511
        %513 = vset.pattern.permute.xlu0 1
        %514 = vperm.xlu0 %513, %v159
        %v515 = vpop.permute.xlu0 %514
        %516 = vset.pattern.permute.xlu0 1
        %517 = vperm.xlu0 %516, %v160
        %v518 = vpop.permute.xlu0 %517
        %519 = vset.pattern.permute.xlu0 1
        %520 = vperm.xlu0 %519, %v161
        %v521 = vpop.permute.xlu0 %520
        %522 = vset.pattern.permute.xlu0 1
        %523 = vperm.xlu0 %522, %v162
        %v524 = vpop.permute.xlu0 %523
        %525 = vset.pattern.permute.xlu0 1
        %526 = vperm.xlu0 %525, %v163
        %v527 = vpop.permute.xlu0 %526
        %528 = vset.pattern.permute.xlu0 1
        %529 = vperm.xlu0 %528, %v164
        %v530 = vpop.permute.xlu0 %529
        %531 = vset.pattern.permute.xlu0 1
        %532 = vperm.xlu0 %531, %v165
        %v533 = vpop.permute.xlu0 %532
        %534 = vset.pattern.permute.xlu0 1
        %535 = vperm.xlu0 %534, %v166
        %v536 = vpop.permute.xlu0 %535
        %537 = vset.pattern.permute.xlu0 1
        %538 = vperm.xlu0 %537, %v167
        %v539 = vpop.permute.xlu0 %538
        %540 = vset.pattern.permute.xlu0 1
        %541 = vperm.xlu0 %540, %v168
        %v542 = vpop.permute.xlu0 %541
        %543 = vset.pattern.permute.xlu0 1
        %544 = vperm.xlu0 %543, %v169
        %v545 = vpop.permute.xlu0 %544
        %546 = vset.pattern.permute.xlu0 1
        %547 = vperm.xlu0 %546, %v170
        %v548 = vpop.permute.xlu0 %547
        %549 = vset.pattern.permute.xlu0 1
        %550 = vperm.xlu0 %549, %v171
        %v551 = vpop.permute.xlu0 %550
        %552 = vset.pattern.permute.xlu0 1
        %553 = vperm.xlu0 %552, %v172
        %v554 = vpop.permute.xlu0 %553
        %555 = vset.pattern.permute.xlu0 1
        %556 = vperm.xlu0 %555, %v173
        %v557 = vpop.permute.xlu0 %556
        %558 = vset.pattern.permute.xlu0 1
        %559 = vperm.xlu0 %558, %v174
        %v560 = vpop.permute.xlu0 %559
        %561 = vset.pattern.permute.xlu0 1
        %562 = vperm.xlu0 %561, %v175
        %v563 = vpop.permute.xlu0 %562
        %564 = vset.pattern.permute.xlu0 1
        %565 = vperm.xlu0 %564, %v176
        %v566 = vpop.permute.xlu0 %565
        %567 = vset.pattern.permute.xlu0 1
        %568 = vperm.xlu0 %567, %v177
        %v569 = vpop.permute.xlu0 %568
        %570 = vset.pattern.permute.xlu0 1
        %571 = vperm.xlu0 %570, %v178
        %v572 = vpop.permute.xlu0 %571
        %573 = vset.pattern.permute.xlu0 1
        %574 = vperm.xlu0 %573, %v179
        %v575 = vpop.permute.xlu0 %574
        %576 = vset.pattern.permute.xlu0 1
        %577 = vperm.xlu0 %576, %v180
        %v578 = vpop.permute.xlu0 %577
        %579 = vset.pattern.permute.xlu0 1
        %580 = vperm.xlu0 %579, %v181
        %v581 = vpop.permute.xlu0 %580
        %582 = vset.pattern.permute.xlu0 1
        %583 = vperm.xlu0 %582, %v182
        %v584 = vpop.permute.xlu0 %583
        %585 = vset.pattern.permute.xlu0 1
        %586 = vperm.xlu0 %585, %v183
        %v587 = vpop.permute.xlu0 %586
        %588 = vset.pattern.permute.xlu0 1
        %589 = vperm.xlu0 %588, %v184
        %v590 = vpop.permute.xlu0 %589
        %591 = vset.pattern.permute.xlu0 1
        %592 = vperm.xlu0 %591, %v185
        %v593 = vpop.permute.xlu0 %592
        %594 = vset.pattern.permute.xlu0 1
        %595 = vperm.xlu0 %594, %v186
        %v596 = vpop.permute.xlu0 %595
        %597 = vset.pattern.permute.xlu0 1
        %598 = vperm.xlu0 %597, %v187
        %v599 = vpop.permute.xlu0 %598
        %600 = vset.pattern.permute.xlu0 1
        %601 = vperm.xlu0 %600, %v188
        %v602 = vpop.permute.xlu0 %601
        %603 = vset.pattern.permute.xlu0 1
        %604 = vperm.xlu0 %603, %v189
        %v605 = vpop.permute.xlu0 %604
        %606 = vset.pattern.permute.xlu0 1
        %607 = vperm.xlu0 %606, %v190
        %v608 = vpop.permute.xlu0 %607
        %609 = vset.pattern.permute.xlu0 1
        %610 = vperm.xlu0 %609, %v191
        %v611 = vpop.permute.xlu0 %610
        %612 = vset.pattern.permute.xlu0 1
        %613 = vperm.xlu0 %612, %v192
        %v614 = vpop.permute.xlu0 %613
        %615 = vset.pattern.permute.xlu0 1
        %616 = vperm.xlu0 %615, %v193
        %v617 = vpop.permute.xlu0 %616
        %618 = vset.pattern.permute.xlu0 1
        %619 = vperm.xlu0 %618, %v194
        %v620 = vpop.permute.xlu0 %619
        %621 = vset.pattern.permute.xlu0 1
        %622 = vperm.xlu0 %621, %v195
        %v623 = vpop.permute.xlu0 %622
        %624 = vset.pattern.permute.xlu0 1
        %625 = vperm.xlu0 %624, %v196
        %v626 = vpop.permute.xlu0 %625
        %627 = vset.pattern.permute.xlu0 1
        %628 = vperm.xlu0 %627, %v197
        %v629 = vpop.permute.xlu0 %628
        %630 = vset.pattern.permute.xlu0 1
        %631 = vperm.xlu0 %630, %v198
        %v632 = vpop.permute.xlu0 %631
        %633 = vset.pattern.permute.xlu0 1
        %634 = vperm.xlu0 %633, %v199
        %v635 = vpop.permute.xlu0 %634
        %vm636 = vcmp.eq.s32.totalorder %v201, %v452
        %vm637 = vcmp.eq.s32.totalorder %v201, %v455
        %vm638 = vcmp.eq.s32.totalorder %v201, %v458
        %vm639 = vcmp.eq.s32.totalorder %v201, %v461
        %vm640 = vcmp.eq.s32.totalorder %v201, %v464
        %vm641 = vcmp.eq.s32.totalorder %v201, %v467
        %vm642 = vcmp.eq.s32.totalorder %v201, %v470
        %vm643 = vcmp.eq.s32.totalorder %v201, %v473
        %vm644 = vcmp.eq.s32.totalorder %v201, %v476
        %vm645 = vcmp.eq.s32.totalorder %v201, %v479
        %vm646 = vcmp.eq.s32.totalorder %v201, %v482
        %vm647 = vcmp.eq.s32.totalorder %v201, %v485
        %vm648 = vcmp.eq.s32.totalorder %v201, %v488
        %vm649 = vcmp.eq.s32.totalorder %v201, %v491
        %vm650 = vcmp.eq.s32.totalorder %v201, %v494
        %vm651 = vcmp.eq.s32.totalorder %v201, %v497
        %vm652 = vcmp.eq.s32.totalorder %v201, %v500
        %vm653 = vcmp.eq.s32.totalorder %v201, %v503
        %vm654 = vcmp.eq.s32.totalorder %v201, %v506
        %vm655 = vcmp.eq.s32.totalorder %v201, %v509
        %vm656 = vcmp.eq.s32.totalorder %v201, %v512
        %vm657 = vcmp.eq.s32.totalorder %v201, %v515
        %vm658 = vcmp.eq.s32.totalorder %v201, %v518
        %vm659 = vcmp.eq.s32.totalorder %v201, %v521
        %vm660 = vcmp.eq.s32.totalorder %v201, %v524
        %vm661 = vcmp.eq.s32.totalorder %v201, %v527
        %vm662 = vcmp.eq.s32.totalorder %v201, %v530
        %vm663 = vcmp.eq.s32.totalorder %v201, %v533
        %vm664 = vcmp.eq.s32.totalorder %v201, %v536
        %vm665 = vcmp.eq.s32.totalorder %v201, %v539
        %vm666 = vcmp.eq.s32.totalorder %v201, %v542
        %vm667 = vcmp.eq.s32.totalorder %v201, %v545
        %vm668 = vcmp.eq.s32.totalorder %v201, %v548
        %vm669 = vcmp.eq.s32.totalorder %v201, %v551
        %vm670 = vcmp.eq.s32.totalorder %v201, %v554
        %vm671 = vcmp.eq.s32.totalorder %v201, %v557
        %vm672 = vcmp.eq.s32.totalorder %v201, %v560
        %vm673 = vcmp.eq.s32.totalorder %v201, %v563
        %vm674 = vcmp.eq.s32.totalorder %v201, %v566
        %vm675 = vcmp.eq.s32.totalorder %v201, %v569
        %vm676 = vcmp.eq.s32.totalorder %v201, %v572
        %vm677 = vcmp.eq.s32.totalorder %v201, %v575
        %vm678 = vcmp.eq.s32.totalorder %v201, %v578
        %vm679 = vcmp.eq.s32.totalorder %v201, %v581
        %vm680 = vcmp.eq.s32.totalorder %v201, %v584
        %vm681 = vcmp.eq.s32.totalorder %v201, %v587
        %vm682 = vcmp.eq.s32.totalorder %v201, %v590
        %vm683 = vcmp.eq.s32.totalorder %v201, %v593
        %vm684 = vcmp.eq.s32.totalorder %v201, %v596
        %vm685 = vcmp.eq.s32.totalorder %v201, %v599
        %vm686 = vcmp.eq.s32.totalorder %v201, %v602
        %vm687 = vcmp.eq.s32.totalorder %v201, %v605
        %vm688 = vcmp.eq.s32.totalorder %v201, %v608
        %vm689 = vcmp.eq.s32.totalorder %v201, %v611
        %vm690 = vcmp.eq.s32.totalorder %v201, %v614
        %vm691 = vcmp.eq.s32.totalorder %v201, %v617
        %vm692 = vcmp.eq.s32.totalorder %v201, %v620
        %vm693 = vcmp.eq.s32.totalorder %v201, %v623
        %vm694 = vcmp.eq.s32.totalorder %v201, %v626
        %vm695 = vcmp.eq.s32.totalorder %v201, %v629
        %vm696 = vcmp.eq.s32.totalorder %v201, %v632
        %vm697 = vcmp.eq.s32.totalorder %v201, %v635
        %vm698 = vmor %vm388, %vm636
        %vm699 = vmor %vm389, %vm637
        %vm700 = vmor %vm390, %vm638
        %vm701 = vmor %vm391, %vm639
        %vm702 = vmor %vm392, %vm640
        %vm703 = vmor %vm393, %vm641
        %vm704 = vmor %vm394, %vm642
        %vm705 = vmor %vm395, %vm643
        %vm706 = vmor %vm396, %vm644
        %vm707 = vmor %vm397, %vm645
        %vm708 = vmor %vm398, %vm646
        %vm709 = vmor %vm399, %vm647
        %vm710 = vmor %vm400, %vm648
        %vm711 = vmor %vm401, %vm649
        %vm712 = vmor %vm402, %vm650
        %vm713 = vmor %vm403, %vm651
        %vm714 = vmor %vm404, %vm652
        %vm715 = vmor %vm405, %vm653
        %vm716 = vmor %vm406, %vm654
        %vm717 = vmor %vm407, %vm655
        %vm718 = vmor %vm408, %vm656
        %vm719 = vmor %vm409, %vm657
        %vm720 = vmor %vm410, %vm658
        %vm721 = vmor %vm411, %vm659
        %vm722 = vmor %vm412, %vm660
        %vm723 = vmor %vm413, %vm661
        %vm724 = vmor %vm414, %vm662
        %vm725 = vmor %vm415, %vm663
        %vm726 = vmor %vm416, %vm664
        %vm727 = vmor %vm417, %vm665
        %vm728 = vmor %vm418, %vm666
        %vm729 = vmor %vm419, %vm667
        %vm730 = vmor %vm420, %vm668
        %vm731 = vmor %vm421, %vm669
        %vm732 = vmor %vm422, %vm670
        %vm733 = vmor %vm423, %vm671
        %vm734 = vmor %vm424, %vm672
        %vm735 = vmor %vm425, %vm673
        %vm736 = vmor %vm426, %vm674
        %vm737 = vmor %vm427, %vm675
        %vm738 = vmor %vm428, %vm676
        %vm739 = vmor %vm429, %vm677
        %vm740 = vmor %vm430, %vm678
        %vm741 = vmor %vm431, %vm679
        %vm742 = vmor %vm432, %vm680
        %vm743 = vmor %vm433, %vm681
        %vm744 = vmor %vm434, %vm682
        %vm745 = vmor %vm435, %vm683
        %vm746 = vmor %vm436, %vm684
        %vm747 = vmor %vm437, %vm685
        %vm748 = vmor %vm438, %vm686
        %vm749 = vmor %vm439, %vm687
        %vm750 = vmor %vm440, %vm688
        %vm751 = vmor %vm441, %vm689
        %vm752 = vmor %vm442, %vm690
        %vm753 = vmor %vm443, %vm691
        %vm754 = vmor %vm444, %vm692
        %vm755 = vmor %vm445, %vm693
        %vm756 = vmor %vm446, %vm694
        %vm757 = vmor %vm447, %vm695
        %vm758 = vmor %vm448, %vm696
        %vm759 = vmor %vm449, %vm697
        %760 = vset.pattern.permute.xlu0 2
        %761 = vperm.xlu0 %760, %v138
        %v762 = vpop.permute.xlu0 %761
        %763 = vset.pattern.permute.xlu0 2
        %764 = vperm.xlu0 %763, %v139
        %v765 = vpop.permute.xlu0 %764
        %766 = vset.pattern.permute.xlu0 2
        %767 = vperm.xlu0 %766, %v140
        %v768 = vpop.permute.xlu0 %767
        %769 = vset.pattern.permute.xlu0 2
        %770 = vperm.xlu0 %769, %v141
        %v771 = vpop.permute.xlu0 %770
        %772 = vset.pattern.permute.xlu0 2
        %773 = vperm.xlu0 %772, %v142
        %v774 = vpop.permute.xlu0 %773
        %775 = vset.pattern.permute.xlu0 2
        %776 = vperm.xlu0 %775, %v143
        %v777 = vpop.permute.xlu0 %776
        %778 = vset.pattern.permute.xlu0 2
        %779 = vperm.xlu0 %778, %v144
        %v780 = vpop.permute.xlu0 %779
        %781 = vset.pattern.permute.xlu0 2
        %782 = vperm.xlu0 %781, %v145
        %v783 = vpop.permute.xlu0 %782
        %784 = vset.pattern.permute.xlu0 2
        %785 = vperm.xlu0 %784, %v146
        %v786 = vpop.permute.xlu0 %785
        %787 = vset.pattern.permute.xlu0 2
        %788 = vperm.xlu0 %787, %v147
        %v789 = vpop.permute.xlu0 %788
        %790 = vset.pattern.permute.xlu0 2
        %791 = vperm.xlu0 %790, %v148
        %v792 = vpop.permute.xlu0 %791
        %793 = vset.pattern.permute.xlu0 2
        %794 = vperm.xlu0 %793, %v149
        %v795 = vpop.permute.xlu0 %794
        %796 = vset.pattern.permute.xlu0 2
        %797 = vperm.xlu0 %796, %v150
        %v798 = vpop.permute.xlu0 %797
        %799 = vset.pattern.permute.xlu0 2
        %800 = vperm.xlu0 %799, %v151
        %v801 = vpop.permute.xlu0 %800
        %802 = vset.pattern.permute.xlu0 2
        %803 = vperm.xlu0 %802, %v152
        %v804 = vpop.permute.xlu0 %803
        %805 = vset.pattern.permute.xlu0 2
        %806 = vperm.xlu0 %805, %v153
        %v807 = vpop.permute.xlu0 %806
        %808 = vset.pattern.permute.xlu0 2
        %809 = vperm.xlu0 %808, %v154
        %v810 = vpop.permute.xlu0 %809
        %811 = vset.pattern.permute.xlu0 2
        %812 = vperm.xlu0 %811, %v155
        %v813 = vpop.permute.xlu0 %812
        %814 = vset.pattern.permute.xlu0 2
        %815 = vperm.xlu0 %814, %v156
        %v816 = vpop.permute.xlu0 %815
        %817 = vset.pattern.permute.xlu0 2
        %818 = vperm.xlu0 %817, %v157
        %v819 = vpop.permute.xlu0 %818
        %820 = vset.pattern.permute.xlu0 2
        %821 = vperm.xlu0 %820, %v158
        %v822 = vpop.permute.xlu0 %821
        %823 = vset.pattern.permute.xlu0 2
        %824 = vperm.xlu0 %823, %v159
        %v825 = vpop.permute.xlu0 %824
        %826 = vset.pattern.permute.xlu0 2
        %827 = vperm.xlu0 %826, %v160
        %v828 = vpop.permute.xlu0 %827
        %829 = vset.pattern.permute.xlu0 2
        %830 = vperm.xlu0 %829, %v161
        %v831 = vpop.permute.xlu0 %830
        %832 = vset.pattern.permute.xlu0 2
        %833 = vperm.xlu0 %832, %v162
        %v834 = vpop.permute.xlu0 %833
        %835 = vset.pattern.permute.xlu0 2
        %836 = vperm.xlu0 %835, %v163
        %v837 = vpop.permute.xlu0 %836
        %838 = vset.pattern.permute.xlu0 2
        %839 = vperm.xlu0 %838, %v164
        %v840 = vpop.permute.xlu0 %839
        %841 = vset.pattern.permute.xlu0 2
        %842 = vperm.xlu0 %841, %v165
        %v843 = vpop.permute.xlu0 %842
        %844 = vset.pattern.permute.xlu0 2
        %845 = vperm.xlu0 %844, %v166
        %v846 = vpop.permute.xlu0 %845
        %847 = vset.pattern.permute.xlu0 2
        %848 = vperm.xlu0 %847, %v167
        %v849 = vpop.permute.xlu0 %848
        %850 = vset.pattern.permute.xlu0 2
        %851 = vperm.xlu0 %850, %v168
        %v852 = vpop.permute.xlu0 %851
        %853 = vset.pattern.permute.xlu0 2
        %854 = vperm.xlu0 %853, %v169
        %v855 = vpop.permute.xlu0 %854
        %856 = vset.pattern.permute.xlu0 2
        %857 = vperm.xlu0 %856, %v170
        %v858 = vpop.permute.xlu0 %857
        %859 = vset.pattern.permute.xlu0 2
        %860 = vperm.xlu0 %859, %v171
        %v861 = vpop.permute.xlu0 %860
        %862 = vset.pattern.permute.xlu0 2
        %863 = vperm.xlu0 %862, %v172
        %v864 = vpop.permute.xlu0 %863
        %865 = vset.pattern.permute.xlu0 2
        %866 = vperm.xlu0 %865, %v173
        %v867 = vpop.permute.xlu0 %866
        %868 = vset.pattern.permute.xlu0 2
        %869 = vperm.xlu0 %868, %v174
        %v870 = vpop.permute.xlu0 %869
        %871 = vset.pattern.permute.xlu0 2
        %872 = vperm.xlu0 %871, %v175
        %v873 = vpop.permute.xlu0 %872
        %874 = vset.pattern.permute.xlu0 2
        %875 = vperm.xlu0 %874, %v176
        %v876 = vpop.permute.xlu0 %875
        %877 = vset.pattern.permute.xlu0 2
        %878 = vperm.xlu0 %877, %v177
        %v879 = vpop.permute.xlu0 %878
        %880 = vset.pattern.permute.xlu0 2
        %881 = vperm.xlu0 %880, %v178
        %v882 = vpop.permute.xlu0 %881
        %883 = vset.pattern.permute.xlu0 2
        %884 = vperm.xlu0 %883, %v179
        %v885 = vpop.permute.xlu0 %884
        %886 = vset.pattern.permute.xlu0 2
        %887 = vperm.xlu0 %886, %v180
        %v888 = vpop.permute.xlu0 %887
        %889 = vset.pattern.permute.xlu0 2
        %890 = vperm.xlu0 %889, %v181
        %v891 = vpop.permute.xlu0 %890
        %892 = vset.pattern.permute.xlu0 2
        %893 = vperm.xlu0 %892, %v182
        %v894 = vpop.permute.xlu0 %893
        %895 = vset.pattern.permute.xlu0 2
        %896 = vperm.xlu0 %895, %v183
        %v897 = vpop.permute.xlu0 %896
        %898 = vset.pattern.permute.xlu0 2
        %899 = vperm.xlu0 %898, %v184
        %v900 = vpop.permute.xlu0 %899
        %901 = vset.pattern.permute.xlu0 2
        %902 = vperm.xlu0 %901, %v185
        %v903 = vpop.permute.xlu0 %902
        %904 = vset.pattern.permute.xlu0 2
        %905 = vperm.xlu0 %904, %v186
        %v906 = vpop.permute.xlu0 %905
        %907 = vset.pattern.permute.xlu0 2
        %908 = vperm.xlu0 %907, %v187
        %v909 = vpop.permute.xlu0 %908
        %910 = vset.pattern.permute.xlu0 2
        %911 = vperm.xlu0 %910, %v188
        %v912 = vpop.permute.xlu0 %911
        %913 = vset.pattern.permute.xlu0 2
        %914 = vperm.xlu0 %913, %v189
        %v915 = vpop.permute.xlu0 %914
        %916 = vset.pattern.permute.xlu0 2
        %917 = vperm.xlu0 %916, %v190
        %v918 = vpop.permute.xlu0 %917
        %919 = vset.pattern.permute.xlu0 2
        %920 = vperm.xlu0 %919, %v191
        %v921 = vpop.permute.xlu0 %920
        %922 = vset.pattern.permute.xlu0 2
        %923 = vperm.xlu0 %922, %v192
        %v924 = vpop.permute.xlu0 %923
        %925 = vset.pattern.permute.xlu0 2
        %926 = vperm.xlu0 %925, %v193
        %v927 = vpop.permute.xlu0 %926
        %928 = vset.pattern.permute.xlu0 2
        %929 = vperm.xlu0 %928, %v194
        %v930 = vpop.permute.xlu0 %929
        %931 = vset.pattern.permute.xlu0 2
        %932 = vperm.xlu0 %931, %v195
        %v933 = vpop.permute.xlu0 %932
        %934 = vset.pattern.permute.xlu0 2
        %935 = vperm.xlu0 %934, %v196
        %v936 = vpop.permute.xlu0 %935
        %937 = vset.pattern.permute.xlu0 2
        %938 = vperm.xlu0 %937, %v197
        %v939 = vpop.permute.xlu0 %938
        %940 = vset.pattern.permute.xlu0 2
        %941 = vperm.xlu0 %940, %v198
        %v942 = vpop.permute.xlu0 %941
        %943 = vset.pattern.permute.xlu0 2
        %944 = vperm.xlu0 %943, %v199
        %v945 = vpop.permute.xlu0 %944
        %vm946 = vcmp.eq.s32.totalorder %v201, %v762
        %vm947 = vcmp.eq.s32.totalorder %v201, %v765
        %vm948 = vcmp.eq.s32.totalorder %v201, %v768
        %vm949 = vcmp.eq.s32.totalorder %v201, %v771
        %vm950 = vcmp.eq.s32.totalorder %v201, %v774
        %vm951 = vcmp.eq.s32.totalorder %v201, %v777
        %vm952 = vcmp.eq.s32.totalorder %v201, %v780
        %vm953 = vcmp.eq.s32.totalorder %v201, %v783
        %vm954 = vcmp.eq.s32.totalorder %v201, %v786
        %vm955 = vcmp.eq.s32.totalorder %v201, %v789
        %vm956 = vcmp.eq.s32.totalorder %v201, %v792
        %vm957 = vcmp.eq.s32.totalorder %v201, %v795
        %vm958 = vcmp.eq.s32.totalorder %v201, %v798
        %vm959 = vcmp.eq.s32.totalorder %v201, %v801
        %vm960 = vcmp.eq.s32.totalorder %v201, %v804
        %vm961 = vcmp.eq.s32.totalorder %v201, %v807
        %vm962 = vcmp.eq.s32.totalorder %v201, %v810
        %vm963 = vcmp.eq.s32.totalorder %v201, %v813
        %vm964 = vcmp.eq.s32.totalorder %v201, %v816
        %vm965 = vcmp.eq.s32.totalorder %v201, %v819
        %vm966 = vcmp.eq.s32.totalorder %v201, %v822
        %vm967 = vcmp.eq.s32.totalorder %v201, %v825
        %vm968 = vcmp.eq.s32.totalorder %v201, %v828
        %vm969 = vcmp.eq.s32.totalorder %v201, %v831
        %vm970 = vcmp.eq.s32.totalorder %v201, %v834
        %vm971 = vcmp.eq.s32.totalorder %v201, %v837
        %vm972 = vcmp.eq.s32.totalorder %v201, %v840
        %vm973 = vcmp.eq.s32.totalorder %v201, %v843
        %vm974 = vcmp.eq.s32.totalorder %v201, %v846
        %vm975 = vcmp.eq.s32.totalorder %v201, %v849
        %vm976 = vcmp.eq.s32.totalorder %v201, %v852
        %vm977 = vcmp.eq.s32.totalorder %v201, %v855
        %vm978 = vcmp.eq.s32.totalorder %v201, %v858
        %vm979 = vcmp.eq.s32.totalorder %v201, %v861
        %vm980 = vcmp.eq.s32.totalorder %v201, %v864
        %vm981 = vcmp.eq.s32.totalorder %v201, %v867
        %vm982 = vcmp.eq.s32.totalorder %v201, %v870
        %vm983 = vcmp.eq.s32.totalorder %v201, %v873
        %vm984 = vcmp.eq.s32.totalorder %v201, %v876
        %vm985 = vcmp.eq.s32.totalorder %v201, %v879
        %vm986 = vcmp.eq.s32.totalorder %v201, %v882
        %vm987 = vcmp.eq.s32.totalorder %v201, %v885
        %vm988 = vcmp.eq.s32.totalorder %v201, %v888
        %vm989 = vcmp.eq.s32.totalorder %v201, %v891
        %vm990 = vcmp.eq.s32.totalorder %v201, %v894
        %vm991 = vcmp.eq.s32.totalorder %v201, %v897
        %vm992 = vcmp.eq.s32.totalorder %v201, %v900
        %vm993 = vcmp.eq.s32.totalorder %v201, %v903
        %vm994 = vcmp.eq.s32.totalorder %v201, %v906
        %vm995 = vcmp.eq.s32.totalorder %v201, %v909
        %vm996 = vcmp.eq.s32.totalorder %v201, %v912
        %vm997 = vcmp.eq.s32.totalorder %v201, %v915
        %vm998 = vcmp.eq.s32.totalorder %v201, %v918
        %vm999 = vcmp.eq.s32.totalorder %v201, %v921
        %vm1000 = vcmp.eq.s32.totalorder %v201, %v924
        %vm1001 = vcmp.eq.s32.totalorder %v201, %v927
        %vm1002 = vcmp.eq.s32.totalorder %v201, %v930
        %vm1003 = vcmp.eq.s32.totalorder %v201, %v933
        %vm1004 = vcmp.eq.s32.totalorder %v201, %v936
        %vm1005 = vcmp.eq.s32.totalorder %v201, %v939
        %vm1006 = vcmp.eq.s32.totalorder %v201, %v942
        %vm1007 = vcmp.eq.s32.totalorder %v201, %v945
        %vm1008 = vmor %vm698, %vm946
        %vm1009 = vmor %vm699, %vm947
        %vm1010 = vmor %vm700, %vm948
        %vm1011 = vmor %vm701, %vm949
        %vm1012 = vmor %vm702, %vm950
        %vm1013 = vmor %vm703, %vm951
        %vm1014 = vmor %vm704, %vm952
        %vm1015 = vmor %vm705, %vm953
        %vm1016 = vmor %vm706, %vm954
        %vm1017 = vmor %vm707, %vm955
        %vm1018 = vmor %vm708, %vm956
        %vm1019 = vmor %vm709, %vm957
        %vm1020 = vmor %vm710, %vm958
        %vm1021 = vmor %vm711, %vm959
        %vm1022 = vmor %vm712, %vm960
        %vm1023 = vmor %vm713, %vm961
        %vm1024 = vmor %vm714, %vm962
        %vm1025 = vmor %vm715, %vm963
        %vm1026 = vmor %vm716, %vm964
        %vm1027 = vmor %vm717, %vm965
        %vm1028 = vmor %vm718, %vm966
        %vm1029 = vmor %vm719, %vm967
        %vm1030 = vmor %vm720, %vm968
        %vm1031 = vmor %vm721, %vm969
        %vm1032 = vmor %vm722, %vm970
        %vm1033 = vmor %vm723, %vm971
        %vm1034 = vmor %vm724, %vm972
        %vm1035 = vmor %vm725, %vm973
        %vm1036 = vmor %vm726, %vm974
        %vm1037 = vmor %vm727, %vm975
        %vm1038 = vmor %vm728, %vm976
        %vm1039 = vmor %vm729, %vm977
        %vm1040 = vmor %vm730, %vm978
        %vm1041 = vmor %vm731, %vm979
        %vm1042 = vmor %vm732, %vm980
        %vm1043 = vmor %vm733, %vm981
        %vm1044 = vmor %vm734, %vm982
        %vm1045 = vmor %vm735, %vm983
        %vm1046 = vmor %vm736, %vm984
        %vm1047 = vmor %vm737, %vm985
        %vm1048 = vmor %vm738, %vm986
        %vm1049 = vmor %vm739, %vm987
        %vm1050 = vmor %vm740, %vm988
        %vm1051 = vmor %vm741, %vm989
        %vm1052 = vmor %vm742, %vm990
        %vm1053 = vmor %vm743, %vm991
        %vm1054 = vmor %vm744, %vm992
        %vm1055 = vmor %vm745, %vm993
        %vm1056 = vmor %vm746, %vm994
        %vm1057 = vmor %vm747, %vm995
        %vm1058 = vmor %vm748, %vm996
        %vm1059 = vmor %vm749, %vm997
        %vm1060 = vmor %vm750, %vm998
        %vm1061 = vmor %vm751, %vm999
        %vm1062 = vmor %vm752, %vm1000
        %vm1063 = vmor %vm753, %vm1001
        %vm1064 = vmor %vm754, %vm1002
        %vm1065 = vmor %vm755, %vm1003
        %vm1066 = vmor %vm756, %vm1004
        %vm1067 = vmor %vm757, %vm1005
        %vm1068 = vmor %vm758, %vm1006
        %vm1069 = vmor %vm759, %vm1007
        %1070 = vset.pattern.permute.xlu0 3
        %1071 = vperm.xlu0 %1070, %v138
        %v1072 = vpop.permute.xlu0 %1071
        %1073 = vset.pattern.permute.xlu0 3
        %1074 = vperm.xlu0 %1073, %v139
        %v1075 = vpop.permute.xlu0 %1074
        %1076 = vset.pattern.permute.xlu0 3
        %1077 = vperm.xlu0 %1076, %v140
        %v1078 = vpop.permute.xlu0 %1077
        %1079 = vset.pattern.permute.xlu0 3
        %1080 = vperm.xlu0 %1079, %v141
        %v1081 = vpop.permute.xlu0 %1080
        %1082 = vset.pattern.permute.xlu0 3
        %1083 = vperm.xlu0 %1082, %v142
        %v1084 = vpop.permute.xlu0 %1083
        %1085 = vset.pattern.permute.xlu0 3
        %1086 = vperm.xlu0 %1085, %v143
        %v1087 = vpop.permute.xlu0 %1086
        %1088 = vset.pattern.permute.xlu0 3
        %1089 = vperm.xlu0 %1088, %v144
        %v1090 = vpop.permute.xlu0 %1089
        %1091 = vset.pattern.permute.xlu0 3
        %1092 = vperm.xlu0 %1091, %v145
        %v1093 = vpop.permute.xlu0 %1092
        %1094 = vset.pattern.permute.xlu0 3
        %1095 = vperm.xlu0 %1094, %v146
        %v1096 = vpop.permute.xlu0 %1095
        %1097 = vset.pattern.permute.xlu0 3
        %1098 = vperm.xlu0 %1097, %v147
        %v1099 = vpop.permute.xlu0 %1098
        %1100 = vset.pattern.permute.xlu0 3
        %1101 = vperm.xlu0 %1100, %v148
        %v1102 = vpop.permute.xlu0 %1101
        %1103 = vset.pattern.permute.xlu0 3
        %1104 = vperm.xlu0 %1103, %v149
        %v1105 = vpop.permute.xlu0 %1104
        %1106 = vset.pattern.permute.xlu0 3
        %1107 = vperm.xlu0 %1106, %v150
        %v1108 = vpop.permute.xlu0 %1107
        %1109 = vset.pattern.permute.xlu0 3
        %1110 = vperm.xlu0 %1109, %v151
        %v1111 = vpop.permute.xlu0 %1110
        %1112 = vset.pattern.permute.xlu0 3
        %1113 = vperm.xlu0 %1112, %v152
        %v1114 = vpop.permute.xlu0 %1113
        %1115 = vset.pattern.permute.xlu0 3
        %1116 = vperm.xlu0 %1115, %v153
        %v1117 = vpop.permute.xlu0 %1116
        %1118 = vset.pattern.permute.xlu0 3
        %1119 = vperm.xlu0 %1118, %v154
        %v1120 = vpop.permute.xlu0 %1119
        %1121 = vset.pattern.permute.xlu0 3
        %1122 = vperm.xlu0 %1121, %v155
        %v1123 = vpop.permute.xlu0 %1122
        %1124 = vset.pattern.permute.xlu0 3
        %1125 = vperm.xlu0 %1124, %v156
        %v1126 = vpop.permute.xlu0 %1125
        %1127 = vset.pattern.permute.xlu0 3
        %1128 = vperm.xlu0 %1127, %v157
        %v1129 = vpop.permute.xlu0 %1128
        %1130 = vset.pattern.permute.xlu0 3
        %1131 = vperm.xlu0 %1130, %v158
        %v1132 = vpop.permute.xlu0 %1131
        %1133 = vset.pattern.permute.xlu0 3
        %1134 = vperm.xlu0 %1133, %v159
        %v1135 = vpop.permute.xlu0 %1134
        %1136 = vset.pattern.permute.xlu0 3
        %1137 = vperm.xlu0 %1136, %v160
        %v1138 = vpop.permute.xlu0 %1137
        %1139 = vset.pattern.permute.xlu0 3
        %1140 = vperm.xlu0 %1139, %v161
        %v1141 = vpop.permute.xlu0 %1140
        %1142 = vset.pattern.permute.xlu0 3
        %1143 = vperm.xlu0 %1142, %v162
        %v1144 = vpop.permute.xlu0 %1143
        %1145 = vset.pattern.permute.xlu0 3
        %1146 = vperm.xlu0 %1145, %v163
        %v1147 = vpop.permute.xlu0 %1146
        %1148 = vset.pattern.permute.xlu0 3
        %1149 = vperm.xlu0 %1148, %v164
        %v1150 = vpop.permute.xlu0 %1149
        %1151 = vset.pattern.permute.xlu0 3
        %1152 = vperm.xlu0 %1151, %v165
        %v1153 = vpop.permute.xlu0 %1152
        %1154 = vset.pattern.permute.xlu0 3
        %1155 = vperm.xlu0 %1154, %v166
        %v1156 = vpop.permute.xlu0 %1155
        %1157 = vset.pattern.permute.xlu0 3
        %1158 = vperm.xlu0 %1157, %v167
        %v1159 = vpop.permute.xlu0 %1158
        %1160 = vset.pattern.permute.xlu0 3
        %1161 = vperm.xlu0 %1160, %v168
        %v1162 = vpop.permute.xlu0 %1161
        %1163 = vset.pattern.permute.xlu0 3
        %1164 = vperm.xlu0 %1163, %v169
        %v1165 = vpop.permute.xlu0 %1164
        %1166 = vset.pattern.permute.xlu0 3
        %1167 = vperm.xlu0 %1166, %v170
        %v1168 = vpop.permute.xlu0 %1167
        %1169 = vset.pattern.permute.xlu0 3
        %1170 = vperm.xlu0 %1169, %v171
        %v1171 = vpop.permute.xlu0 %1170
        %1172 = vset.pattern.permute.xlu0 3
        %1173 = vperm.xlu0 %1172, %v172
        %v1174 = vpop.permute.xlu0 %1173
        %1175 = vset.pattern.permute.xlu0 3
        %1176 = vperm.xlu0 %1175, %v173
        %v1177 = vpop.permute.xlu0 %1176
        %1178 = vset.pattern.permute.xlu0 3
        %1179 = vperm.xlu0 %1178, %v174
        %v1180 = vpop.permute.xlu0 %1179
        %1181 = vset.pattern.permute.xlu0 3
        %1182 = vperm.xlu0 %1181, %v175
        %v1183 = vpop.permute.xlu0 %1182
        %1184 = vset.pattern.permute.xlu0 3
        %1185 = vperm.xlu0 %1184, %v176
        %v1186 = vpop.permute.xlu0 %1185
        %1187 = vset.pattern.permute.xlu0 3
        %1188 = vperm.xlu0 %1187, %v177
        %v1189 = vpop.permute.xlu0 %1188
        %1190 = vset.pattern.permute.xlu0 3
        %1191 = vperm.xlu0 %1190, %v178
        %v1192 = vpop.permute.xlu0 %1191
        %1193 = vset.pattern.permute.xlu0 3
        %1194 = vperm.xlu0 %1193, %v179
        %v1195 = vpop.permute.xlu0 %1194
        %1196 = vset.pattern.permute.xlu0 3
        %1197 = vperm.xlu0 %1196, %v180
        %v1198 = vpop.permute.xlu0 %1197
        %1199 = vset.pattern.permute.xlu0 3
        %1200 = vperm.xlu0 %1199, %v181
        %v1201 = vpop.permute.xlu0 %1200
        %1202 = vset.pattern.permute.xlu0 3
        %1203 = vperm.xlu0 %1202, %v182
        %v1204 = vpop.permute.xlu0 %1203
        %1205 = vset.pattern.permute.xlu0 3
        %1206 = vperm.xlu0 %1205, %v183
        %v1207 = vpop.permute.xlu0 %1206
        %1208 = vset.pattern.permute.xlu0 3
        %1209 = vperm.xlu0 %1208, %v184
        %v1210 = vpop.permute.xlu0 %1209
        %1211 = vset.pattern.permute.xlu0 3
        %1212 = vperm.xlu0 %1211, %v185
        %v1213 = vpop.permute.xlu0 %1212
        %1214 = vset.pattern.permute.xlu0 3
        %1215 = vperm.xlu0 %1214, %v186
        %v1216 = vpop.permute.xlu0 %1215
        %1217 = vset.pattern.permute.xlu0 3
        %1218 = vperm.xlu0 %1217, %v187
        %v1219 = vpop.permute.xlu0 %1218
        %1220 = vset.pattern.permute.xlu0 3
        %1221 = vperm.xlu0 %1220, %v188
        %v1222 = vpop.permute.xlu0 %1221
        %1223 = vset.pattern.permute.xlu0 3
        %1224 = vperm.xlu0 %1223, %v189
        %v1225 = vpop.permute.xlu0 %1224
        %1226 = vset.pattern.permute.xlu0 3
        %1227 = vperm.xlu0 %1226, %v190
        %v1228 = vpop.permute.xlu0 %1227
        %1229 = vset.pattern.permute.xlu0 3
        %1230 = vperm.xlu0 %1229, %v191
        %v1231 = vpop.permute.xlu0 %1230
        %1232 = vset.pattern.permute.xlu0 3
        %1233 = vperm.xlu0 %1232, %v192
        %v1234 = vpop.permute.xlu0 %1233
        %1235 = vset.pattern.permute.xlu0 3
        %1236 = vperm.xlu0 %1235, %v193
        %v1237 = vpop.permute.xlu0 %1236
        %1238 = vset.pattern.permute.xlu0 3
        %1239 = vperm.xlu0 %1238, %v194
        %v1240 = vpop.permute.xlu0 %1239
        %1241 = vset.pattern.permute.xlu0 3
        %1242 = vperm.xlu0 %1241, %v195
        %v1243 = vpop.permute.xlu0 %1242
        %1244 = vset.pattern.permute.xlu0 3
        %1245 = vperm.xlu0 %1244, %v196
        %v1246 = vpop.permute.xlu0 %1245
        %1247 = vset.pattern.permute.xlu0 3
        %1248 = vperm.xlu0 %1247, %v197
        %v1249 = vpop.permute.xlu0 %1248
        %1250 = vset.pattern.permute.xlu0 3
        %1251 = vperm.xlu0 %1250, %v198
        %v1252 = vpop.permute.xlu0 %1251
        %1253 = vset.pattern.permute.xlu0 3
        %1254 = vperm.xlu0 %1253, %v199
        %v1255 = vpop.permute.xlu0 %1254
        %vm1256 = vcmp.eq.s32.totalorder %v201, %v1072
        %vm1257 = vcmp.eq.s32.totalorder %v201, %v1075
        %vm1258 = vcmp.eq.s32.totalorder %v201, %v1078
        %vm1259 = vcmp.eq.s32.totalorder %v201, %v1081
        %vm1260 = vcmp.eq.s32.totalorder %v201, %v1084
        %vm1261 = vcmp.eq.s32.totalorder %v201, %v1087
        %vm1262 = vcmp.eq.s32.totalorder %v201, %v1090
        %vm1263 = vcmp.eq.s32.totalorder %v201, %v1093
        %vm1264 = vcmp.eq.s32.totalorder %v201, %v1096
        %vm1265 = vcmp.eq.s32.totalorder %v201, %v1099
        %vm1266 = vcmp.eq.s32.totalorder %v201, %v1102
        %vm1267 = vcmp.eq.s32.totalorder %v201, %v1105
        %vm1268 = vcmp.eq.s32.totalorder %v201, %v1108
        %vm1269 = vcmp.eq.s32.totalorder %v201, %v1111
        %vm1270 = vcmp.eq.s32.totalorder %v201, %v1114
        %vm1271 = vcmp.eq.s32.totalorder %v201, %v1117
        %vm1272 = vcmp.eq.s32.totalorder %v201, %v1120
        %vm1273 = vcmp.eq.s32.totalorder %v201, %v1123
        %vm1274 = vcmp.eq.s32.totalorder %v201, %v1126
        %vm1275 = vcmp.eq.s32.totalorder %v201, %v1129
        %vm1276 = vcmp.eq.s32.totalorder %v201, %v1132
        %vm1277 = vcmp.eq.s32.totalorder %v201, %v1135
        %vm1278 = vcmp.eq.s32.totalorder %v201, %v1138
        %vm1279 = vcmp.eq.s32.totalorder %v201, %v1141
        %vm1280 = vcmp.eq.s32.totalorder %v201, %v1144
        %vm1281 = vcmp.eq.s32.totalorder %v201, %v1147
        %vm1282 = vcmp.eq.s32.totalorder %v201, %v1150
        %vm1283 = vcmp.eq.s32.totalorder %v201, %v1153
        %vm1284 = vcmp.eq.s32.totalorder %v201, %v1156
        %vm1285 = vcmp.eq.s32.totalorder %v201, %v1159
        %vm1286 = vcmp.eq.s32.totalorder %v201, %v1162
        %vm1287 = vcmp.eq.s32.totalorder %v201, %v1165
        %vm1288 = vcmp.eq.s32.totalorder %v201, %v1168
        %vm1289 = vcmp.eq.s32.totalorder %v201, %v1171
        %vm1290 = vcmp.eq.s32.totalorder %v201, %v1174
        %vm1291 = vcmp.eq.s32.totalorder %v201, %v1177
        %vm1292 = vcmp.eq.s32.totalorder %v201, %v1180
        %vm1293 = vcmp.eq.s32.totalorder %v201, %v1183
        %vm1294 = vcmp.eq.s32.totalorder %v201, %v1186
        %vm1295 = vcmp.eq.s32.totalorder %v201, %v1189
        %vm1296 = vcmp.eq.s32.totalorder %v201, %v1192
        %vm1297 = vcmp.eq.s32.totalorder %v201, %v1195
        %vm1298 = vcmp.eq.s32.totalorder %v201, %v1198
        %vm1299 = vcmp.eq.s32.totalorder %v201, %v1201
        %vm1300 = vcmp.eq.s32.totalorder %v201, %v1204
        %vm1301 = vcmp.eq.s32.totalorder %v201, %v1207
        %vm1302 = vcmp.eq.s32.totalorder %v201, %v1210
        %vm1303 = vcmp.eq.s32.totalorder %v201, %v1213
        %vm1304 = vcmp.eq.s32.totalorder %v201, %v1216
        %vm1305 = vcmp.eq.s32.totalorder %v201, %v1219
        %vm1306 = vcmp.eq.s32.totalorder %v201, %v1222
        %vm1307 = vcmp.eq.s32.totalorder %v201, %v1225
        %vm1308 = vcmp.eq.s32.totalorder %v201, %v1228
        %vm1309 = vcmp.eq.s32.totalorder %v201, %v1231
        %vm1310 = vcmp.eq.s32.totalorder %v201, %v1234
        %vm1311 = vcmp.eq.s32.totalorder %v201, %v1237
        %vm1312 = vcmp.eq.s32.totalorder %v201, %v1240
        %vm1313 = vcmp.eq.s32.totalorder %v201, %v1243
        %vm1314 = vcmp.eq.s32.totalorder %v201, %v1246
        %vm1315 = vcmp.eq.s32.totalorder %v201, %v1249
        %vm1316 = vcmp.eq.s32.totalorder %v201, %v1252
        %vm1317 = vcmp.eq.s32.totalorder %v201, %v1255
        %vm1318 = vmor %vm1008, %vm1256
        %vm1319 = vmor %vm1009, %vm1257
        %vm1320 = vmor %vm1010, %vm1258
        %vm1321 = vmor %vm1011, %vm1259
        %vm1322 = vmor %vm1012, %vm1260
        %vm1323 = vmor %vm1013, %vm1261
        %vm1324 = vmor %vm1014, %vm1262
        %vm1325 = vmor %vm1015, %vm1263
        %vm1326 = vmor %vm1016, %vm1264
        %vm1327 = vmor %vm1017, %vm1265
        %vm1328 = vmor %vm1018, %vm1266
        %vm1329 = vmor %vm1019, %vm1267
        %vm1330 = vmor %vm1020, %vm1268
        %vm1331 = vmor %vm1021, %vm1269
        %vm1332 = vmor %vm1022, %vm1270
        %vm1333 = vmor %vm1023, %vm1271
        %vm1334 = vmor %vm1024, %vm1272
        %vm1335 = vmor %vm1025, %vm1273
        %vm1336 = vmor %vm1026, %vm1274
        %vm1337 = vmor %vm1027, %vm1275
        %vm1338 = vmor %vm1028, %vm1276
        %vm1339 = vmor %vm1029, %vm1277
        %vm1340 = vmor %vm1030, %vm1278
        %vm1341 = vmor %vm1031, %vm1279
        %vm1342 = vmor %vm1032, %vm1280
        %vm1343 = vmor %vm1033, %vm1281
        %vm1344 = vmor %vm1034, %vm1282
        %vm1345 = vmor %vm1035, %vm1283
        %vm1346 = vmor %vm1036, %vm1284
        %vm1347 = vmor %vm1037, %vm1285
        %vm1348 = vmor %vm1038, %vm1286
        %vm1349 = vmor %vm1039, %vm1287
        %vm1350 = vmor %vm1040, %vm1288
        %vm1351 = vmor %vm1041, %vm1289
        %vm1352 = vmor %vm1042, %vm1290
        %vm1353 = vmor %vm1043, %vm1291
        %vm1354 = vmor %vm1044, %vm1292
        %vm1355 = vmor %vm1045, %vm1293
        %vm1356 = vmor %vm1046, %vm1294
        %vm1357 = vmor %vm1047, %vm1295
        %vm1358 = vmor %vm1048, %vm1296
        %vm1359 = vmor %vm1049, %vm1297
        %vm1360 = vmor %vm1050, %vm1298
        %vm1361 = vmor %vm1051, %vm1299
        %vm1362 = vmor %vm1052, %vm1300
        %vm1363 = vmor %vm1053, %vm1301
        %vm1364 = vmor %vm1054, %vm1302
        %vm1365 = vmor %vm1055, %vm1303
        %vm1366 = vmor %vm1056, %vm1304
        %vm1367 = vmor %vm1057, %vm1305
        %vm1368 = vmor %vm1058, %vm1306
        %vm1369 = vmor %vm1059, %vm1307
        %vm1370 = vmor %vm1060, %vm1308
        %vm1371 = vmor %vm1061, %vm1309
        %vm1372 = vmor %vm1062, %vm1310
        %vm1373 = vmor %vm1063, %vm1311
        %vm1374 = vmor %vm1064, %vm1312
        %vm1375 = vmor %vm1065, %vm1313
        %vm1376 = vmor %vm1066, %vm1314
        %vm1377 = vmor %vm1067, %vm1315
        %vm1378 = vmor %vm1068, %vm1316
        %vm1379 = vmor %vm1069, %vm1317
        %v1380 = vsel %vm1318, 1, 0
        %v1381 = vsel %vm1319, 1, 0
        %v1382 = vsel %vm1320, 1, 0
        %v1383 = vsel %vm1321, 1, 0
        %v1384 = vsel %vm1322, 1, 0
        %v1385 = vsel %vm1323, 1, 0
        %v1386 = vsel %vm1324, 1, 0
        %v1387 = vsel %vm1325, 1, 0
        %v1388 = vsel %vm1326, 1, 0
        %v1389 = vsel %vm1327, 1, 0
        %v1390 = vsel %vm1328, 1, 0
        %v1391 = vsel %vm1329, 1, 0
        %v1392 = vsel %vm1330, 1, 0
        %v1393 = vsel %vm1331, 1, 0
        %v1394 = vsel %vm1332, 1, 0
        %v1395 = vsel %vm1333, 1, 0
        %v1396 = vsel %vm1334, 1, 0
        %v1397 = vsel %vm1335, 1, 0
        %v1398 = vsel %vm1336, 1, 0
        %v1399 = vsel %vm1337, 1, 0
        %v1400 = vsel %vm1338, 1, 0
        %v1401 = vsel %vm1339, 1, 0
        %v1402 = vsel %vm1340, 1, 0
        %v1403 = vsel %vm1341, 1, 0
        %v1404 = vsel %vm1342, 1, 0
        %v1405 = vsel %vm1343, 1, 0
        %v1406 = vsel %vm1344, 1, 0
        %v1407 = vsel %vm1345, 1, 0
        %v1408 = vsel %vm1346, 1, 0
        %v1409 = vsel %vm1347, 1, 0
        %v1410 = vsel %vm1348, 1, 0
        %v1411 = vsel %vm1349, 1, 0
        %v1412 = vsel %vm1350, 1, 0
        %v1413 = vsel %vm1351, 1, 0
        %v1414 = vsel %vm1352, 1, 0
        %v1415 = vsel %vm1353, 1, 0
        %v1416 = vsel %vm1354, 1, 0
        %v1417 = vsel %vm1355, 1, 0
        %v1418 = vsel %vm1356, 1, 0
        %v1419 = vsel %vm1357, 1, 0
        %v1420 = vsel %vm1358, 1, 0
        %v1421 = vsel %vm1359, 1, 0
        %v1422 = vsel %vm1360, 1, 0
        %v1423 = vsel %vm1361, 1, 0
        %v1424 = vsel %vm1362, 1, 0
        %v1425 = vsel %vm1363, 1, 0
        %v1426 = vsel %vm1364, 1, 0
        %v1427 = vsel %vm1365, 1, 0
        %v1428 = vsel %vm1366, 1, 0
        %v1429 = vsel %vm1367, 1, 0
        %v1430 = vsel %vm1368, 1, 0
        %v1431 = vsel %vm1369, 1, 0
        %v1432 = vsel %vm1370, 1, 0
        %v1433 = vsel %vm1371, 1, 0
        %v1434 = vsel %vm1372, 1, 0
        %v1435 = vsel %vm1373, 1, 0
        %v1436 = vsel %vm1374, 1, 0
        %v1437 = vsel %vm1375, 1, 0
        %v1438 = vsel %vm1376, 1, 0
        %v1439 = vsel %vm1377, 1, 0
        %v1440 = vsel %vm1378, 1, 0
        %v1441 = vsel %vm1379, 1, 0
        %v1442 = vcvt.s32.f32 %v1380
        %v1443 = vcvt.s32.f32 %v1381
        %v1444 = vcvt.s32.f32 %v1382
        %v1445 = vcvt.s32.f32 %v1383
        %v1446 = vcvt.s32.f32 %v1384
        %v1447 = vcvt.s32.f32 %v1385
        %v1448 = vcvt.s32.f32 %v1386
        %v1449 = vcvt.s32.f32 %v1387
        %v1450 = vcvt.s32.f32 %v1388
        %v1451 = vcvt.s32.f32 %v1389
        %v1452 = vcvt.s32.f32 %v1390
        %v1453 = vcvt.s32.f32 %v1391
        %v1454 = vcvt.s32.f32 %v1392
        %v1455 = vcvt.s32.f32 %v1393
        %v1456 = vcvt.s32.f32 %v1394
        %v1457 = vcvt.s32.f32 %v1395
        %v1458 = vcvt.s32.f32 %v1396
        %v1459 = vcvt.s32.f32 %v1397
        %v1460 = vcvt.s32.f32 %v1398
        %v1461 = vcvt.s32.f32 %v1399
        %v1462 = vcvt.s32.f32 %v1400
        %v1463 = vcvt.s32.f32 %v1401
        %v1464 = vcvt.s32.f32 %v1402
        %v1465 = vcvt.s32.f32 %v1403
        %v1466 = vcvt.s32.f32 %v1404
        %v1467 = vcvt.s32.f32 %v1405
        %v1468 = vcvt.s32.f32 %v1406
        %v1469 = vcvt.s32.f32 %v1407
        %v1470 = vcvt.s32.f32 %v1408
        %v1471 = vcvt.s32.f32 %v1409
        %v1472 = vcvt.s32.f32 %v1410
        %v1473 = vcvt.s32.f32 %v1411
        %v1474 = vcvt.s32.f32 %v1412
        %v1475 = vcvt.s32.f32 %v1413
        %v1476 = vcvt.s32.f32 %v1414
        %v1477 = vcvt.s32.f32 %v1415
        %v1478 = vcvt.s32.f32 %v1416
        %v1479 = vcvt.s32.f32 %v1417
        %v1480 = vcvt.s32.f32 %v1418
        %v1481 = vcvt.s32.f32 %v1419
        %v1482 = vcvt.s32.f32 %v1420
        %v1483 = vcvt.s32.f32 %v1421
        %v1484 = vcvt.s32.f32 %v1422
        %v1485 = vcvt.s32.f32 %v1423
        %v1486 = vcvt.s32.f32 %v1424
        %v1487 = vcvt.s32.f32 %v1425
        %v1488 = vcvt.s32.f32 %v1426
        %v1489 = vcvt.s32.f32 %v1427
        %v1490 = vcvt.s32.f32 %v1428
        %v1491 = vcvt.s32.f32 %v1429
        %v1492 = vcvt.s32.f32 %v1430
        %v1493 = vcvt.s32.f32 %v1431
        %v1494 = vcvt.s32.f32 %v1432
        %v1495 = vcvt.s32.f32 %v1433
        %v1496 = vcvt.s32.f32 %v1434
        %v1497 = vcvt.s32.f32 %v1435
        %v1498 = vcvt.s32.f32 %v1436
        %v1499 = vcvt.s32.f32 %v1437
        %v1500 = vcvt.s32.f32 %v1438
        %v1501 = vcvt.s32.f32 %v1439
        %v1502 = vcvt.s32.f32 %v1440
        %v1503 = vcvt.s32.f32 %v1441
        %vm1504 = vcmask 146432
        %1505 = vst.msk [vmem:[%s118] sm:$0xff] %vm1504, %v1442
        %1506 = vst.msk [vmem:[%s118 + $0x8] sm:$0xff] %vm1504, %v1443
        %1507 = vst.msk [vmem:[%s118 + $0x10] sm:$0xff] %vm1504, %v1444
        %1508 = vst.msk [vmem:[%s118 + $0x18] sm:$0xff] %vm1504, %v1445
        %1509 = vst.msk [vmem:[%s118 + $0x20] sm:$0xff] %vm1504, %v1446
        %1510 = vst.msk [vmem:[%s118 + $0x28] sm:$0xff] %vm1504, %v1447
        %1511 = vst.msk [vmem:[%s118 + $0x30] sm:$0xff] %vm1504, %v1448
        %1512 = vst.msk [vmem:[%s118 + $0x38] sm:$0xff] %vm1504, %v1449
        %1513 = vst.msk [vmem:[%s118 + $0x40] sm:$0xff] %vm1504, %v1450
        %1514 = vst.msk [vmem:[%s118 + $0x48] sm:$0xff] %vm1504, %v1451
        %1515 = vst.msk [vmem:[%s118 + $0x50] sm:$0xff] %vm1504, %v1452
        %1516 = vst.msk [vmem:[%s118 + $0x58] sm:$0xff] %vm1504, %v1453
        %1517 = vst.msk [vmem:[%s118 + $0x60] sm:$0xff] %vm1504, %v1454
        %1518 = vst.msk [vmem:[%s118 + $0x68] sm:$0xff] %vm1504, %v1455
        %1519 = vst.msk [vmem:[%s118 + $0x70] sm:$0xff] %vm1504, %v1456
        %1520 = vst.msk [vmem:[%s118 + $0x78] sm:$0xff] %vm1504, %v1457
        %1521 = vst.msk [vmem:[%s118 + $0x80] sm:$0xff] %vm1504, %v1458
        %1522 = vst.msk [vmem:[%s118 + $0x88] sm:$0xff] %vm1504, %v1459
        %1523 = vst.msk [vmem:[%s118 + $0x90] sm:$0xff] %vm1504, %v1460
        %1524 = vst.msk [vmem:[%s118 + $0x98] sm:$0xff] %vm1504, %v1461
        %1525 = vst.msk [vmem:[%s118 + $0xa0] sm:$0xff] %vm1504, %v1462
        %1526 = vst.msk [vmem:[%s118 + $0xa8] sm:$0xff] %vm1504, %v1463
        %1527 = vst.msk [vmem:[%s118 + $0xb0] sm:$0xff] %vm1504, %v1464
        %1528 = vst.msk [vmem:[%s118 + $0xb8] sm:$0xff] %vm1504, %v1465
        %1529 = vst.msk [vmem:[%s118 + $0xc0] sm:$0xff] %vm1504, %v1466
        %1530 = vst.msk [vmem:[%s118 + $0xc8] sm:$0xff] %vm1504, %v1467
        %1531 = vst.msk [vmem:[%s118 + $0xd0] sm:$0xff] %vm1504, %v1468
        %1532 = vst.msk [vmem:[%s118 + $0xd8] sm:$0xff] %vm1504, %v1469
        %1533 = vst.msk [vmem:[%s118 + $0xe0] sm:$0xff] %vm1504, %v1470
        %1534 = vst.msk [vmem:[%s118 + $0xe8] sm:$0xff] %vm1504, %v1471
        %1535 = vst.msk [vmem:[%s118 + $0xf0] sm:$0xff] %vm1504, %v1472
        %1536 = vst.msk [vmem:[%s118 + $0xf8] sm:$0xff] %vm1504, %v1473
        %1537 = vst.msk [vmem:[%s118 + $0x100] sm:$0xff] %vm1504, %v1474
        %1538 = vst.msk [vmem:[%s118 + $0x108] sm:$0xff] %vm1504, %v1475
        %1539 = vst.msk [vmem:[%s118 + $0x110] sm:$0xff] %vm1504, %v1476
        %1540 = vst.msk [vmem:[%s118 + $0x118] sm:$0xff] %vm1504, %v1477
        %1541 = vst.msk [vmem:[%s118 + $0x120] sm:$0xff] %vm1504, %v1478
        %1542 = vst.msk [vmem:[%s118 + $0x128] sm:$0xff] %vm1504, %v1479
        %1543 = vst.msk [vmem:[%s118 + $0x130] sm:$0xff] %vm1504, %v1480
        %1544 = vst.msk [vmem:[%s118 + $0x138] sm:$0xff] %vm1504, %v1481
        %1545 = vst.msk [vmem:[%s118 + $0x140] sm:$0xff] %vm1504, %v1482
        %1546 = vst.msk [vmem:[%s118 + $0x148] sm:$0xff] %vm1504, %v1483
        %1547 = vst.msk [vmem:[%s118 + $0x150] sm:$0xff] %vm1504, %v1484
        %1548 = vst.msk [vmem:[%s118 + $0x158] sm:$0xff] %vm1504, %v1485
        %1549 = vst.msk [vmem:[%s118 + $0x160] sm:$0xff] %vm1504, %v1486
        %1550 = vst.msk [vmem:[%s118 + $0x168] sm:$0xff] %vm1504, %v1487
        %1551 = vst.msk [vmem:[%s118 + $0x170] sm:$0xff] %vm1504, %v1488
        %1552 = vst.msk [vmem:[%s118 + $0x178] sm:$0xff] %vm1504, %v1489
        %1553 = vst.msk [vmem:[%s118 + $0x180] sm:$0xff] %vm1504, %v1490
        %1554 = vst.msk [vmem:[%s118 + $0x188] sm:$0xff] %vm1504, %v1491
        %1555 = vst.msk [vmem:[%s118 + $0x190] sm:$0xff] %vm1504, %v1492
        %1556 = vst.msk [vmem:[%s118 + $0x198] sm:$0xff] %vm1504, %v1493
        %1557 = vst.msk [vmem:[%s118 + $0x1a0] sm:$0xff] %vm1504, %v1494
        %1558 = vst.msk [vmem:[%s118 + $0x1a8] sm:$0xff] %vm1504, %v1495
        %1559 = vst.msk [vmem:[%s118 + $0x1b0] sm:$0xff] %vm1504, %v1496
        %1560 = vst.msk [vmem:[%s118 + $0x1b8] sm:$0xff] %vm1504, %v1497
        %1561 = vst.msk [vmem:[%s118 + $0x1c0] sm:$0xff] %vm1504, %v1498
        %1562 = vst.msk [vmem:[%s118 + $0x1c8] sm:$0xff] %vm1504, %v1499
        %1563 = vst.msk [vmem:[%s118 + $0x1d0] sm:$0xff] %vm1504, %v1500
        %1564 = vst.msk [vmem:[%s118 + $0x1d8] sm:$0xff] %vm1504, %v1501
        %1565 = vst.msk [vmem:[%s118 + $0x1e0] sm:$0xff] %vm1504, %v1502
        %1566 = vst.msk [vmem:[%s118 + $0x1e8] sm:$0xff] %vm1504, %v1503
        %s1567 = sand.u32 %s46, 1
        %s1568 = sand.u32 %s46, 1
        %s1569 = smul.addr %s1568, 496
        %s1570 = scalar_lea.vmem [#allocation2], %s1569
        // Predicated region
        $region25: #{tpu_custom_call.1} parent=23 // pred_check
          %p1571 = pneg %p56
        $region26: #{tpu_custom_call.1} parent=23 // pred_check_branch
          %1573 = sbr.rel (%p1571) target = $region28
        $region27: #{tpu_custom_call.1} parent=23 // pred_region
          %s1574 = smul.u32 62, %s12
          %s1575 = ssub.s32 63, %s1574
          %p1576 = scmp.lt.s32.totalorder %s1575, 62
          %s1577 = scalar_select %p1576, %s1575, 62
          %s1578 = smul.u32 128, %s1577
          %p1579 = scmp.ne.s32.totalorder 0, %s1578
          %s1580 = smul.addr %s1574, 8
          %s1581 = scalar_lea.vmem %s1, %s1580
          // Predicated region
          $region29: #{tpu_custom_call.1} parent=27 // pred_check
            %p1582 = pneg %p1579
          $region30: #{tpu_custom_call.1} parent=27 // pred_check_branch
            %1584 = sbr.rel (%p1582) target = $region32
          $region31: #{tpu_custom_call.1} parent=27 // pred_region
            // Predicated region
            $region33: #{tpu_custom_call.1} parent=31 // pred_check
              _
            $region34: #{tpu_custom_call.1} parent=31 // pred_check_branch
              %1586 = sbr.rel (0) target = $region36
            $region35: #{tpu_custom_call.1} parent=31 // pred_region
              // Predicated region
              $region55: #{tpu_custom_call.1} parent=35 // pred_check
                _
              $region56: #{tpu_custom_call.1} parent=35 // pred_check_branch
                %1758 = sbr.rel (0) target = $region58
              $region57: #{tpu_custom_call.1} parent=35 // pred_region
                %s1759 = sdiv.u32.pop %s1577, 62
                %s1760 = srem.u32.pop %s1577, 62
                // While loop
                $region59: #{tpu_custom_call.1} parent=57 // loop_pre_header
                  _
                $region60: #{tpu_custom_call.1} parent=57 // loop_header
                  %s1762 = sphi 0, %s1764
                  %p1763 = scmp.ge.s32.totalorder %s1762, %s1759
                  %s1767 = sphi 0, %s1896
                  %s1768 = sphi %s1570, %s1899
                  %s1769 = sphi %s1581, %s1900
                $region61: #{tpu_custom_call.1} parent=57 // loop_header_branch
                  %1766 = sbr.rel (%p1763) target = $region65
                $region62: #{tpu_custom_call.1} parent=57 // loop_body
                  %v1770 = vld [vmem:[%s1768] sm:$0xff]
                  %1771 = vst [vmem:[%s1769] sm:$0xff] %v1770
                  %v1772 = vld [vmem:[%s1768 + $0x8] sm:$0xff]
                  %1773 = vst [vmem:[%s1769 + $0x8] sm:$0xff] %v1772
                  %v1774 = vld [vmem:[%s1768 + $0x10] sm:$0xff]
                  %1775 = vst [vmem:[%s1769 + $0x10] sm:$0xff] %v1774
                  %v1776 = vld [vmem:[%s1768 + $0x18] sm:$0xff]
                  %1777 = vst [vmem:[%s1769 + $0x18] sm:$0xff] %v1776
                  %v1778 = vld [vmem:[%s1768 + $0x20] sm:$0xff]
                  %1779 = vst [vmem:[%s1769 + $0x20] sm:$0xff] %v1778
                  %v1780 = vld [vmem:[%s1768 + $0x28] sm:$0xff]
                  %1781 = vst [vmem:[%s1769 + $0x28] sm:$0xff] %v1780
                  %v1782 = vld [vmem:[%s1768 + $0x30] sm:$0xff]
                  %1783 = vst [vmem:[%s1769 + $0x30] sm:$0xff] %v1782
                  %v1784 = vld [vmem:[%s1768 + $0x38] sm:$0xff]
                  %1785 = vst [vmem:[%s1769 + $0x38] sm:$0xff] %v1784
                  %v1786 = vld [vmem:[%s1768 + $0x40] sm:$0xff]
                  %1787 = vst [vmem:[%s1769 + $0x40] sm:$0xff] %v1786
                  %v1788 = vld [vmem:[%s1768 + $0x48] sm:$0xff]
                  %1789 = vst [vmem:[%s1769 + $0x48] sm:$0xff] %v1788
                  %v1790 = vld [vmem:[%s1768 + $0x50] sm:$0xff]
                  %1791 = vst [vmem:[%s1769 + $0x50] sm:$0xff] %v1790
                  %v1792 = vld [vmem:[%s1768 + $0x58] sm:$0xff]
                  %1793 = vst [vmem:[%s1769 + $0x58] sm:$0xff] %v1792
                  %v1794 = vld [vmem:[%s1768 + $0x60] sm:$0xff]
                  %1795 = vst [vmem:[%s1769 + $0x60] sm:$0xff] %v1794
                  %v1796 = vld [vmem:[%s1768 + $0x68] sm:$0xff]
                  %1797 = vst [vmem:[%s1769 + $0x68] sm:$0xff] %v1796
                  %v1798 = vld [vmem:[%s1768 + $0x70] sm:$0xff]
                  %1799 = vst [vmem:[%s1769 + $0x70] sm:$0xff] %v1798
                  %v1800 = vld [vmem:[%s1768 + $0x78] sm:$0xff]
                  %1801 = vst [vmem:[%s1769 + $0x78] sm:$0xff] %v1800
                  %v1802 = vld [vmem:[%s1768 + $0x80] sm:$0xff]
                  %1803 = vst [vmem:[%s1769 + $0x80] sm:$0xff] %v1802
                  %v1804 = vld [vmem:[%s1768 + $0x88] sm:$0xff]
                  %1805 = vst [vmem:[%s1769 + $0x88] sm:$0xff] %v1804
                  %v1806 = vld [vmem:[%s1768 + $0x90] sm:$0xff]
                  %1807 = vst [vmem:[%s1769 + $0x90] sm:$0xff] %v1806
                  %v1808 = vld [vmem:[%s1768 + $0x98] sm:$0xff]
                  %1809 = vst [vmem:[%s1769 + $0x98] sm:$0xff] %v1808
                  %v1810 = vld [vmem:[%s1768 + $0xa0] sm:$0xff]
                  %1811 = vst [vmem:[%s1769 + $0xa0] sm:$0xff] %v1810
                  %v1812 = vld [vmem:[%s1768 + $0xa8] sm:$0xff]
                  %1813 = vst [vmem:[%s1769 + $0xa8] sm:$0xff] %v1812
                  %v1814 = vld [vmem:[%s1768 + $0xb0] sm:$0xff]
                  %1815 = vst [vmem:[%s1769 + $0xb0] sm:$0xff] %v1814
                  %v1816 = vld [vmem:[%s1768 + $0xb8] sm:$0xff]
                  %1817 = vst [vmem:[%s1769 + $0xb8] sm:$0xff] %v1816
                  %v1818 = vld [vmem:[%s1768 + $0xc0] sm:$0xff]
                  %1819 = vst [vmem:[%s1769 + $0xc0] sm:$0xff] %v1818
                  %v1820 = vld [vmem:[%s1768 + $0xc8] sm:$0xff]
                  %1821 = vst [vmem:[%s1769 + $0xc8] sm:$0xff] %v1820
                  %v1822 = vld [vmem:[%s1768 + $0xd0] sm:$0xff]
                  %1823 = vst [vmem:[%s1769 + $0xd0] sm:$0xff] %v1822
                  %v1824 = vld [vmem:[%s1768 + $0xd8] sm:$0xff]
                  %1825 = vst [vmem:[%s1769 + $0xd8] sm:$0xff] %v1824
                  %v1826 = vld [vmem:[%s1768 + $0xe0] sm:$0xff]
                  %1827 = vst [vmem:[%s1769 + $0xe0] sm:$0xff] %v1826
                  %v1828 = vld [vmem:[%s1768 + $0xe8] sm:$0xff]
                  %1829 = vst [vmem:[%s1769 + $0xe8] sm:$0xff] %v1828
                  %v1830 = vld [vmem:[%s1768 + $0xf0] sm:$0xff]
                  %1831 = vst [vmem:[%s1769 + $0xf0] sm:$0xff] %v1830
                  %v1832 = vld [vmem:[%s1768 + $0xf8] sm:$0xff]
                  %1833 = vst [vmem:[%s1769 + $0xf8] sm:$0xff] %v1832
                  %v1834 = vld [vmem:[%s1768 + $0x100] sm:$0xff]
                  %1835 = vst [vmem:[%s1769 + $0x100] sm:$0xff] %v1834
                  %v1836 = vld [vmem:[%s1768 + $0x108] sm:$0xff]
                  %1837 = vst [vmem:[%s1769 + $0x108] sm:$0xff] %v1836
                  %v1838 = vld [vmem:[%s1768 + $0x110] sm:$0xff]
                  %1839 = vst [vmem:[%s1769 + $0x110] sm:$0xff] %v1838
                  %v1840 = vld [vmem:[%s1768 + $0x118] sm:$0xff]
                  %1841 = vst [vmem:[%s1769 + $0x118] sm:$0xff] %v1840
                  %v1842 = vld [vmem:[%s1768 + $0x120] sm:$0xff]
                  %1843 = vst [vmem:[%s1769 + $0x120] sm:$0xff] %v1842
                  %v1844 = vld [vmem:[%s1768 + $0x128] sm:$0xff]
                  %1845 = vst [vmem:[%s1769 + $0x128] sm:$0xff] %v1844
                  %v1846 = vld [vmem:[%s1768 + $0x130] sm:$0xff]
                  %1847 = vst [vmem:[%s1769 + $0x130] sm:$0xff] %v1846
                  %v1848 = vld [vmem:[%s1768 + $0x138] sm:$0xff]
                  %1849 = vst [vmem:[%s1769 + $0x138] sm:$0xff] %v1848
                  %v1850 = vld [vmem:[%s1768 + $0x140] sm:$0xff]
                  %1851 = vst [vmem:[%s1769 + $0x140] sm:$0xff] %v1850
                  %v1852 = vld [vmem:[%s1768 + $0x148] sm:$0xff]
                  %1853 = vst [vmem:[%s1769 + $0x148] sm:$0xff] %v1852
                  %v1854 = vld [vmem:[%s1768 + $0x150] sm:$0xff]
                  %1855 = vst [vmem:[%s1769 + $0x150] sm:$0xff] %v1854
                  %v1856 = vld [vmem:[%s1768 + $0x158] sm:$0xff]
                  %1857 = vst [vmem:[%s1769 + $0x158] sm:$0xff] %v1856
                  %v1858 = vld [vmem:[%s1768 + $0x160] sm:$0xff]
                  %1859 = vst [vmem:[%s1769 + $0x160] sm:$0xff] %v1858
                  %v1860 = vld [vmem:[%s1768 + $0x168] sm:$0xff]
                  %1861 = vst [vmem:[%s1769 + $0x168] sm:$0xff] %v1860
                  %v1862 = vld [vmem:[%s1768 + $0x170] sm:$0xff]
                  %1863 = vst [vmem:[%s1769 + $0x170] sm:$0xff] %v1862
                  %v1864 = vld [vmem:[%s1768 + $0x178] sm:$0xff]
                  %1865 = vst [vmem:[%s1769 + $0x178] sm:$0xff] %v1864
                  %v1866 = vld [vmem:[%s1768 + $0x180] sm:$0xff]
                  %1867 = vst [vmem:[%s1769 + $0x180] sm:$0xff] %v1866
                  %v1868 = vld [vmem:[%s1768 + $0x188] sm:$0xff]
                  %1869 = vst [vmem:[%s1769 + $0x188] sm:$0xff] %v1868
                  %v1870 = vld [vmem:[%s1768 + $0x190] sm:$0xff]
                  %1871 = vst [vmem:[%s1769 + $0x190] sm:$0xff] %v1870
                  %v1872 = vld [vmem:[%s1768 + $0x198] sm:$0xff]
                  %1873 = vst [vmem:[%s1769 + $0x198] sm:$0xff] %v1872
                  %v1874 = vld [vmem:[%s1768 + $0x1a0] sm:$0xff]
                  %1875 = vst [vmem:[%s1769 + $0x1a0] sm:$0xff] %v1874
                  %v1876 = vld [vmem:[%s1768 + $0x1a8] sm:$0xff]
                  %1877 = vst [vmem:[%s1769 + $0x1a8] sm:$0xff] %v1876
                  %v1878 = vld [vmem:[%s1768 + $0x1b0] sm:$0xff]
                  %1879 = vst [vmem:[%s1769 + $0x1b0] sm:$0xff] %v1878
                  %v1880 = vld [vmem:[%s1768 + $0x1b8] sm:$0xff]
                  %1881 = vst [vmem:[%s1769 + $0x1b8] sm:$0xff] %v1880
                  %v1882 = vld [vmem:[%s1768 + $0x1c0] sm:$0xff]
                  %1883 = vst [vmem:[%s1769 + $0x1c0] sm:$0xff] %v1882
                  %v1884 = vld [vmem:[%s1768 + $0x1c8] sm:$0xff]
                  %1885 = vst [vmem:[%s1769 + $0x1c8] sm:$0xff] %v1884
                  %v1886 = vld [vmem:[%s1768 + $0x1d0] sm:$0xff]
                  %1887 = vst [vmem:[%s1769 + $0x1d0] sm:$0xff] %v1886
                  %v1888 = vld [vmem:[%s1768 + $0x1d8] sm:$0xff]
                  %1889 = vst [vmem:[%s1769 + $0x1d8] sm:$0xff] %v1888
                  %v1890 = vld [vmem:[%s1768 + $0x1e0] sm:$0xff]
                  %1891 = vst [vmem:[%s1769 + $0x1e0] sm:$0xff] %v1890
                  %v1892 = vld [vmem:[%s1768 + $0x1e8] sm:$0xff]
                  %1893 = vst [vmem:[%s1769 + $0x1e8] sm:$0xff] %v1892
                  %s1894 = sadd.s32 1, %s1767
                  %p1895 = scmp.ge.s32.totalorder %s1894, %s1759
                  %s1896 = scalar_select %p1895, 0, %s1894
                  %s1897 = smul.u32 %s1896, 496
                  %s1898 = smul.u32 %s1896, 496
                  %s1899 = scalar_lea.vmem %s1570, %s1897 [#allocation2]
                  %s1900 = scalar_lea.vmem %s1581, %s1898
                $region63: #{tpu_custom_call.1} parent=57 // loop_footer
                  %s1764 = sadd.s32 %s1762, 1
                $region64: #{tpu_custom_call.1} parent=57 // loop_footer_branch
                  %1761 = sbr.rel target = $region60
                $region65: #{tpu_custom_call.1} parent=57 // loop_exit
                  _
                %s1901 = sdiv.u32.pop %s1577, 62
                %s1902 = srem.u32.pop %s1577, 62
                %s1903 = smul.u32 %s1901, 62
                %s1904 = smul.u32 8, %s1903
                %s1905 = scalar_lea.vmem %s1570, %s1904 [#allocation2]
                %s1906 = smul.u32 8, %s1903
                %s1907 = scalar_lea.vmem %s1581, %s1906
                // While loop
                $region66: #{tpu_custom_call.1} parent=57 // loop_pre_header
                  _
                $region67: #{tpu_custom_call.1} parent=57 // loop_header
                  %s1909 = sphi 0, %s1911
                  %p1910 = scmp.ge.s32.totalorder %s1909, %s1902
                  %s1914 = sphi 0, %s1921
                  %s1915 = sphi %s1905, %s1924
                  %s1916 = sphi %s1907, %s1925
                $region68: #{tpu_custom_call.1} parent=57 // loop_header_branch
                  %1913 = sbr.rel (%p1910) target = $region72
                $region69: #{tpu_custom_call.1} parent=57 // loop_body
                  %v1917 = vld [vmem:[%s1915] sm:$0xff]
                  %1918 = vst [vmem:[%s1916] sm:$0xff] %v1917
                  %s1919 = sadd.s32 1, %s1914
                  %p1920 = scmp.ge.s32.totalorder %s1919, %s1902
                  %s1921 = scalar_select %p1920, 0, %s1919
                  %s1922 = smul.u32 %s1921, 8
                  %s1923 = smul.u32 %s1921, 8
                  %s1924 = scalar_lea.vmem %s1905, %s1922 [#allocation2]
                  %s1925 = scalar_lea.vmem %s1907, %s1923
                $region70: #{tpu_custom_call.1} parent=57 // loop_footer
                  %s1911 = sadd.s32 %s1909, 1
                $region71: #{tpu_custom_call.1} parent=57 // loop_footer_branch
                  %1908 = sbr.rel target = $region67
                $region72: #{tpu_custom_call.1} parent=57 // loop_exit
                  _
              $region58: #{tpu_custom_call.1} parent=35 // pred_fallthru
                _
              // Predicated region
              $region73: #{tpu_custom_call.1} parent=35 // pred_check
                _
              $region74: #{tpu_custom_call.1} parent=35 // pred_check_branch
                %1927 = sbr.rel target = $region76
              $region75: #{tpu_custom_call.1} parent=35 // pred_region
                _
              $region76: #{tpu_custom_call.1} parent=35 // pred_fallthru
                _
            $region36: #{tpu_custom_call.1} parent=31 // pred_fallthru
              _
            // Predicated region
            $region37: #{tpu_custom_call.1} parent=31 // pred_check
              _
            $region38: #{tpu_custom_call.1} parent=31 // pred_check_branch
              %1588 = sbr.rel target = $region40
            $region39: #{tpu_custom_call.1} parent=31 // pred_region
              %s1590 = sdiv.u32.pop %s1577, 62
              %s1591 = srem.u32.pop %s1577, 62
              // While loop
              $region41: #{tpu_custom_call.1} parent=39 // loop_pre_header
                _
              $region42: #{tpu_custom_call.1} parent=39 // loop_header
                %s1593 = sphi 0, %s1595
                %p1594 = scmp.ge.s32.totalorder %s1593, %s1590
                %s1598 = sphi 0, %s1727
                %s1599 = sphi %s1570, %s1730
                %s1600 = sphi %s1581, %s1731
              $region43: #{tpu_custom_call.1} parent=39 // loop_header_branch
                %1597 = sbr.rel (%p1594) target = $region47
              $region44: #{tpu_custom_call.1} parent=39 // loop_body
                %v1601 = vld [vmem:[%s1599] sm:$0xff]
                %1602 = vst [vmem:[%s1600] sm:$0xff] %v1601
                %v1603 = vld [vmem:[%s1599 + $0x8] sm:$0xff]
                %1604 = vst [vmem:[%s1600 + $0x8] sm:$0xff] %v1603
                %v1605 = vld [vmem:[%s1599 + $0x10] sm:$0xff]
                %1606 = vst [vmem:[%s1600 + $0x10] sm:$0xff] %v1605
                %v1607 = vld [vmem:[%s1599 + $0x18] sm:$0xff]
                %1608 = vst [vmem:[%s1600 + $0x18] sm:$0xff] %v1607
                %v1609 = vld [vmem:[%s1599 + $0x20] sm:$0xff]
                %1610 = vst [vmem:[%s1600 + $0x20] sm:$0xff] %v1609
                %v1611 = vld [vmem:[%s1599 + $0x28] sm:$0xff]
                %1612 = vst [vmem:[%s1600 + $0x28] sm:$0xff] %v1611
                %v1613 = vld [vmem:[%s1599 + $0x30] sm:$0xff]
                %1614 = vst [vmem:[%s1600 + $0x30] sm:$0xff] %v1613
                %v1615 = vld [vmem:[%s1599 + $0x38] sm:$0xff]
                %1616 = vst [vmem:[%s1600 + $0x38] sm:$0xff] %v1615
                %v1617 = vld [vmem:[%s1599 + $0x40] sm:$0xff]
                %1618 = vst [vmem:[%s1600 + $0x40] sm:$0xff] %v1617
                %v1619 = vld [vmem:[%s1599 + $0x48] sm:$0xff]
                %1620 = vst [vmem:[%s1600 + $0x48] sm:$0xff] %v1619
                %v1621 = vld [vmem:[%s1599 + $0x50] sm:$0xff]
                %1622 = vst [vmem:[%s1600 + $0x50] sm:$0xff] %v1621
                %v1623 = vld [vmem:[%s1599 + $0x58] sm:$0xff]
                %1624 = vst [vmem:[%s1600 + $0x58] sm:$0xff] %v1623
                %v1625 = vld [vmem:[%s1599 + $0x60] sm:$0xff]
                %1626 = vst [vmem:[%s1600 + $0x60] sm:$0xff] %v1625
                %v1627 = vld [vmem:[%s1599 + $0x68] sm:$0xff]
                %1628 = vst [vmem:[%s1600 + $0x68] sm:$0xff] %v1627
                %v1629 = vld [vmem:[%s1599 + $0x70] sm:$0xff]
                %1630 = vst [vmem:[%s1600 + $0x70] sm:$0xff] %v1629
                %v1631 = vld [vmem:[%s1599 + $0x78] sm:$0xff]
                %1632 = vst [vmem:[%s1600 + $0x78] sm:$0xff] %v1631
                %v1633 = vld [vmem:[%s1599 + $0x80] sm:$0xff]
                %1634 = vst [vmem:[%s1600 + $0x80] sm:$0xff] %v1633
                %v1635 = vld [vmem:[%s1599 + $0x88] sm:$0xff]
                %1636 = vst [vmem:[%s1600 + $0x88] sm:$0xff] %v1635
                %v1637 = vld [vmem:[%s1599 + $0x90] sm:$0xff]
                %1638 = vst [vmem:[%s1600 + $0x90] sm:$0xff] %v1637
                %v1639 = vld [vmem:[%s1599 + $0x98] sm:$0xff]
                %1640 = vst [vmem:[%s1600 + $0x98] sm:$0xff] %v1639
                %v1641 = vld [vmem:[%s1599 + $0xa0] sm:$0xff]
                %1642 = vst [vmem:[%s1600 + $0xa0] sm:$0xff] %v1641
                %v1643 = vld [vmem:[%s1599 + $0xa8] sm:$0xff]
                %1644 = vst [vmem:[%s1600 + $0xa8] sm:$0xff] %v1643
                %v1645 = vld [vmem:[%s1599 + $0xb0] sm:$0xff]
                %1646 = vst [vmem:[%s1600 + $0xb0] sm:$0xff] %v1645
                %v1647 = vld [vmem:[%s1599 + $0xb8] sm:$0xff]
                %1648 = vst [vmem:[%s1600 + $0xb8] sm:$0xff] %v1647
                %v1649 = vld [vmem:[%s1599 + $0xc0] sm:$0xff]
                %1650 = vst [vmem:[%s1600 + $0xc0] sm:$0xff] %v1649
                %v1651 = vld [vmem:[%s1599 + $0xc8] sm:$0xff]
                %1652 = vst [vmem:[%s1600 + $0xc8] sm:$0xff] %v1651
                %v1653 = vld [vmem:[%s1599 + $0xd0] sm:$0xff]
                %1654 = vst [vmem:[%s1600 + $0xd0] sm:$0xff] %v1653
                %v1655 = vld [vmem:[%s1599 + $0xd8] sm:$0xff]
                %1656 = vst [vmem:[%s1600 + $0xd8] sm:$0xff] %v1655
                %v1657 = vld [vmem:[%s1599 + $0xe0] sm:$0xff]
                %1658 = vst [vmem:[%s1600 + $0xe0] sm:$0xff] %v1657
                %v1659 = vld [vmem:[%s1599 + $0xe8] sm:$0xff]
                %1660 = vst [vmem:[%s1600 + $0xe8] sm:$0xff] %v1659
                %v1661 = vld [vmem:[%s1599 + $0xf0] sm:$0xff]
                %1662 = vst [vmem:[%s1600 + $0xf0] sm:$0xff] %v1661
                %v1663 = vld [vmem:[%s1599 + $0xf8] sm:$0xff]
                %1664 = vst [vmem:[%s1600 + $0xf8] sm:$0xff] %v1663
                %v1665 = vld [vmem:[%s1599 + $0x100] sm:$0xff]
                %1666 = vst [vmem:[%s1600 + $0x100] sm:$0xff] %v1665
                %v1667 = vld [vmem:[%s1599 + $0x108] sm:$0xff]
                %1668 = vst [vmem:[%s1600 + $0x108] sm:$0xff] %v1667
                %v1669 = vld [vmem:[%s1599 + $0x110] sm:$0xff]
                %1670 = vst [vmem:[%s1600 + $0x110] sm:$0xff] %v1669
                %v1671 = vld [vmem:[%s1599 + $0x118] sm:$0xff]
                %1672 = vst [vmem:[%s1600 + $0x118] sm:$0xff] %v1671
                %v1673 = vld [vmem:[%s1599 + $0x120] sm:$0xff]
                %1674 = vst [vmem:[%s1600 + $0x120] sm:$0xff] %v1673
                %v1675 = vld [vmem:[%s1599 + $0x128] sm:$0xff]
                %1676 = vst [vmem:[%s1600 + $0x128] sm:$0xff] %v1675
                %v1677 = vld [vmem:[%s1599 + $0x130] sm:$0xff]
                %1678 = vst [vmem:[%s1600 + $0x130] sm:$0xff] %v1677
                %v1679 = vld [vmem:[%s1599 + $0x138] sm:$0xff]
                %1680 = vst [vmem:[%s1600 + $0x138] sm:$0xff] %v1679
                %v1681 = vld [vmem:[%s1599 + $0x140] sm:$0xff]
                %1682 = vst [vmem:[%s1600 + $0x140] sm:$0xff] %v1681
                %v1683 = vld [vmem:[%s1599 + $0x148] sm:$0xff]
                %1684 = vst [vmem:[%s1600 + $0x148] sm:$0xff] %v1683
                %v1685 = vld [vmem:[%s1599 + $0x150] sm:$0xff]
                %1686 = vst [vmem:[%s1600 + $0x150] sm:$0xff] %v1685
                %v1687 = vld [vmem:[%s1599 + $0x158] sm:$0xff]
                %1688 = vst [vmem:[%s1600 + $0x158] sm:$0xff] %v1687
                %v1689 = vld [vmem:[%s1599 + $0x160] sm:$0xff]
                %1690 = vst [vmem:[%s1600 + $0x160] sm:$0xff] %v1689
                %v1691 = vld [vmem:[%s1599 + $0x168] sm:$0xff]
                %1692 = vst [vmem:[%s1600 + $0x168] sm:$0xff] %v1691
                %v1693 = vld [vmem:[%s1599 + $0x170] sm:$0xff]
                %1694 = vst [vmem:[%s1600 + $0x170] sm:$0xff] %v1693
                %v1695 = vld [vmem:[%s1599 + $0x178] sm:$0xff]
                %1696 = vst [vmem:[%s1600 + $0x178] sm:$0xff] %v1695
                %v1697 = vld [vmem:[%s1599 + $0x180] sm:$0xff]
                %1698 = vst [vmem:[%s1600 + $0x180] sm:$0xff] %v1697
                %v1699 = vld [vmem:[%s1599 + $0x188] sm:$0xff]
                %1700 = vst [vmem:[%s1600 + $0x188] sm:$0xff] %v1699
                %v1701 = vld [vmem:[%s1599 + $0x190] sm:$0xff]
                %1702 = vst [vmem:[%s1600 + $0x190] sm:$0xff] %v1701
                %v1703 = vld [vmem:[%s1599 + $0x198] sm:$0xff]
                %1704 = vst [vmem:[%s1600 + $0x198] sm:$0xff] %v1703
                %v1705 = vld [vmem:[%s1599 + $0x1a0] sm:$0xff]
                %1706 = vst [vmem:[%s1600 + $0x1a0] sm:$0xff] %v1705
                %v1707 = vld [vmem:[%s1599 + $0x1a8] sm:$0xff]
                %1708 = vst [vmem:[%s1600 + $0x1a8] sm:$0xff] %v1707
                %v1709 = vld [vmem:[%s1599 + $0x1b0] sm:$0xff]
                %1710 = vst [vmem:[%s1600 + $0x1b0] sm:$0xff] %v1709
                %v1711 = vld [vmem:[%s1599 + $0x1b8] sm:$0xff]
                %1712 = vst [vmem:[%s1600 + $0x1b8] sm:$0xff] %v1711
                %v1713 = vld [vmem:[%s1599 + $0x1c0] sm:$0xff]
                %1714 = vst [vmem:[%s1600 + $0x1c0] sm:$0xff] %v1713
                %v1715 = vld [vmem:[%s1599 + $0x1c8] sm:$0xff]
                %1716 = vst [vmem:[%s1600 + $0x1c8] sm:$0xff] %v1715
                %v1717 = vld [vmem:[%s1599 + $0x1d0] sm:$0xff]
                %1718 = vst [vmem:[%s1600 + $0x1d0] sm:$0xff] %v1717
                %v1719 = vld [vmem:[%s1599 + $0x1d8] sm:$0xff]
                %1720 = vst [vmem:[%s1600 + $0x1d8] sm:$0xff] %v1719
                %v1721 = vld [vmem:[%s1599 + $0x1e0] sm:$0xff]
                %1722 = vst [vmem:[%s1600 + $0x1e0] sm:$0xff] %v1721
                %v1723 = vld [vmem:[%s1599 + $0x1e8] sm:$0xff]
                %1724 = vst [vmem:[%s1600 + $0x1e8] sm:$0xff] %v1723
                %s1725 = sadd.s32 1, %s1598
                %p1726 = scmp.ge.s32.totalorder %s1725, %s1590
                %s1727 = scalar_select %p1726, 0, %s1725
                %s1728 = smul.u32 %s1727, 496
                %s1729 = smul.u32 %s1727, 496
                %s1730 = scalar_lea.vmem %s1570, %s1728 [#allocation2]
                %s1731 = scalar_lea.vmem %s1581, %s1729
              $region45: #{tpu_custom_call.1} parent=39 // loop_footer
                %s1595 = sadd.s32 %s1593, 1
              $region46: #{tpu_custom_call.1} parent=39 // loop_footer_branch
                %1592 = sbr.rel target = $region42
              $region47: #{tpu_custom_call.1} parent=39 // loop_exit
                _
              %s1732 = sdiv.u32.pop %s1577, 62
              %s1733 = srem.u32.pop %s1577, 62
              %s1734 = smul.u32 %s1732, 62
              %s1735 = smul.u32 8, %s1734
              %s1736 = scalar_lea.vmem %s1570, %s1735 [#allocation2]
              %s1737 = smul.u32 8, %s1734
              %s1738 = scalar_lea.vmem %s1581, %s1737
              // While loop
              $region48: #{tpu_custom_call.1} parent=39 // loop_pre_header
                _
              $region49: #{tpu_custom_call.1} parent=39 // loop_header
                %s1740 = sphi 0, %s1742
                %p1741 = scmp.ge.s32.totalorder %s1740, %s1733
                %s1745 = sphi 0, %s1752
                %s1746 = sphi %s1736, %s1755
                %s1747 = sphi %s1738, %s1756
              $region50: #{tpu_custom_call.1} parent=39 // loop_header_branch
                %1744 = sbr.rel (%p1741) target = $region54
              $region51: #{tpu_custom_call.1} parent=39 // loop_body
                %v1748 = vld [vmem:[%s1746] sm:$0xff]
                %1749 = vst [vmem:[%s1747] sm:$0xff] %v1748
                %s1750 = sadd.s32 1, %s1745
                %p1751 = scmp.ge.s32.totalorder %s1750, %s1733
                %s1752 = scalar_select %p1751, 0, %s1750
                %s1753 = smul.u32 %s1752, 8
                %s1754 = smul.u32 %s1752, 8
                %s1755 = scalar_lea.vmem %s1736, %s1753 [#allocation2]
                %s1756 = scalar_lea.vmem %s1738, %s1754
              $region52: #{tpu_custom_call.1} parent=39 // loop_footer
                %s1742 = sadd.s32 %s1740, 1
              $region53: #{tpu_custom_call.1} parent=39 // loop_footer_branch
                %1739 = sbr.rel target = $region49
              $region54: #{tpu_custom_call.1} parent=39 // loop_exit
                _
            $region40: #{tpu_custom_call.1} parent=31 // pred_fallthru
              _
          $region32: #{tpu_custom_call.1} parent=27 // pred_fallthru
            _
          %1928 = vnop
        $region28: #{tpu_custom_call.1} parent=23 // pred_fallthru
          _
      $region24: #{tpu_custom_call.1} parent=5 // pred_fallthru
        _
      %p1929 = scmp.le.s32.totalorder 2, %s7
      // Predicated region
      $region77: #{tpu_custom_call.1} parent=5 // pred_check
        %p1930 = pneg %p1929
      $region78: #{tpu_custom_call.1} parent=5 // pred_check_branch
        %1932 = sbr.rel (%p1930) target = $region80
      $region79: #{tpu_custom_call.1} parent=5 // pred_region
        %s1933 = ssub.s32 %s7, 2
        // Predicated region
        $region81: #{tpu_custom_call.1} parent=79 // pred_check
          %p1934 = pneg %p62
        $region82: #{tpu_custom_call.1} parent=79 // pred_check_branch
          %1936 = sbr.rel (%p1934) target = $region84
        $region83: #{tpu_custom_call.1} parent=79 // pred_region
          %s1937 = sand.u32 %s47, 1
          %s1938 = sand.u32 %s47, 1
          %s1939 = smul.addr %s1938, 496
          %s1940 = scalar_lea.vmem [#allocation2], %s1939
        $region84: #{tpu_custom_call.1} parent=79 // pred_fallthru
          _
      $region80: #{tpu_custom_call.1} parent=5 // pred_fallthru
        _
    $region6: #{tpu_custom_call.1} parent=1 // loop_footer
      %s11 = sadd.s32 1, %s7
    $region7: #{tpu_custom_call.1} parent=1 // loop_footer_branch
      %6 = sbr.rel target = $region3
    $region8: #{tpu_custom_call.1} parent=1 // loop_exit
      _

</llo_original>
